<compile_context>
chip_gen: v7x
topology: tpu7x:2x2x1
jax: 0.10.0
libtpu: 0.0.40
codegen_flags: <defaults>
</compile_context>

<pallas_src>
import functools

import jax
import jax.numpy as jnp
from jax import lax
from jax.experimental import pallas as pl
from jax.experimental.pallas import tpu as pltpu

# ----------------------------- problem sizes -----------------------------
BATCH = 2          # B
SEQ = 8            # T
IN_DIM = 10        # input_dim
W0 = 32            # widths[0]  (Linear out / RNN in)
HID = 32           # widths[1]  (RNN hidden)
OUT_DIM = 10       # output_dim


def _round_up(x, m):
    return (x + m - 1) // m * m


# ------------------------------- kernel ----------------------------------
def _rnn_head_kernel(x_ref, w1_ref, b1_ref, wih_ref, bc_ref, whh_ref,
                     w2_ref, b2_ref, o_ref):
    bb, T, d = x_ref.shape
    x = x_ref[...].reshape(bb * T, d)            # batch-major flatten (free)

    # Stage 1 (off the recurrent critical path): Linear(IN_DIM->W0)+ReLU fused
    # with the hoisted input-to-hidden projection of the RNN.  bc = b_ih+b_hh.
    h1 = jnp.maximum(
        jnp.dot(x, w1_ref[...], preferred_element_type=jnp.float32)
        + b1_ref[...], 0.0)                                       # (bb*T, W0)
    pre = (jnp.dot(h1, wih_ref[...], preferred_element_type=jnp.float32)
           + bc_ref[...]).reshape(bb, T, HID)                     # (bb, T, HID)

    # Weights loaded exactly once, outside the unrolled recurrence.
    whh = whh_ref[...]
    w2 = w2_ref[...]
    b2 = b2_ref[...]

    # Stage 2+3: serial recurrence (T static -> fully unrolled) with a
    # per-step output projection + store.  The projection/store of step t is
    # independent of step t+1's tanh chain, so it overlaps with it.
    h = jnp.zeros((bb, HID), jnp.float32)
    for t in range(T):
        h = jnp.tanh(pre[:, t, :]
                     + jnp.dot(h, whh, preferred_element_type=jnp.float32))
        o_ref[:, t, :] = (jnp.dot(h, w2, preferred_element_type=jnp.float32)
                          + b2)


def rnn_head_pallas(x, kparams, *, block_b):
    """x: (B_pad, T, IN_DIM) batch-first, B_pad a multiple of block_b."""
    w1, b1, wih, bc, whh, w2, b2 = kparams
    b_pad, T, d = x.shape
    grid = (b_pad // block_b,)

    flops = 2 * b_pad * T * (IN_DIM * W0 + W0 * HID + HID * HID + HID * OUT_DIM)
    bytes_accessed = 4 * (int(x.size) + b_pad * T * OUT_DIM
                          + sum(int(p.size) for p in kparams))
    cost = pl.CostEstimate(flops=flops,
                           transcendentals=b_pad * T * HID,
                           bytes_accessed=bytes_accessed)

    return pl.pallas_call(
        _rnn_head_kernel,
        out_shape=jax.ShapeDtypeStruct((b_pad, T, OUT_DIM), jnp.float32),
        grid=grid,
        in_specs=[
            pl.BlockSpec((block_b, T, d), lambda i: (i, 0, 0)),   # x
            pl.BlockSpec((IN_DIM, W0), lambda i: (0, 0)),         # w1
            pl.BlockSpec((1, W0), lambda i: (0, 0)),              # b1
            pl.BlockSpec((W0, HID), lambda i: (0, 0)),            # wih
            pl.BlockSpec((1, HID), lambda i: (0, 0)),             # bc
            pl.BlockSpec((HID, HID), lambda i: (0, 0)),           # whh
            pl.BlockSpec((HID, OUT_DIM), lambda i: (0, 0)),       # w2
            pl.BlockSpec((1, OUT_DIM), lambda i: (0, 0)),         # b2
        ],
        out_specs=pl.BlockSpec((block_b, T, OUT_DIM), lambda i: (i, 0, 0)),
        compiler_params=pltpu.CompilerParams(
            dimension_semantics=("parallel",),
            vmem_limit_bytes=(64 * 1024 * 1024 if block_b > 128 else None)),
        cost_estimate=cost,
    )(x, w1, b1, wih, bc, whh, w2, b2)


def prepare_kernel_params(params):
    """Fuse the two RNN biases (b_ih + b_hh); no other preprocessing needed."""
    w1, b1, wih, bih, whh, bhh, w2, b2 = params
    return (w1, b1, wih, bih + bhh, whh, w2, b2)


def rnn_head_forward(x, kparams):
    """x: (B, T, IN_DIM) batch-first, exactly as the PyTorch module sees it."""
    B, T, _ = x.shape
    if B <= 8:
        block_b = B                      # full-dim block: no pad, no slice
    else:
        # >= 2 batch blocks so v7x's two TensorCores both get work via the
        # "parallel" grid axis; blocks capped ~512 rows (VMEM / roofline sweet
        # spot), sublane-aligned to 8.
        n_blocks = max(2, pl.cdiv(B, 512))
        block_b = _round_up(pl.cdiv(B, n_blocks), 8)
    b_pad = _round_up(B, block_b)
    xp = x if b_pad == B else jnp.pad(x, ((0, b_pad - B), (0, 0), (0, 0)))
    y = rnn_head_pallas(xp, kparams, block_b=block_b)   # (b_pad, T, OUT_DIM)
    return y if b_pad == B else y[:B]


# ------------------------- pure-JAX reference -----------------------------
def rnn_head_reference(x, params):
    w1, b1, wih, bih, whh, bhh, w2, b2 = params
    h = jnp.maximum(jnp.einsum("btd,dw->btw", x, w1) + b1[0], 0.0)  # (B,T,W0)

    def step(h_prev, xt):
        h_new = jnp.tanh(xt @ wih + bih[0] + h_prev @ whh + bhh[0])
        return h_new, h_new

    h0 = jnp.zeros((x.shape[0], HID), jnp.float32)
    _, hs = lax.scan(step, h0, jnp.transpose(h, (1, 0, 2)))         # (T,B,HID)
    hs = jnp.transpose(hs, (1, 0, 2))                               # (B,T,HID)
    return jnp.einsum("bth,ho->bto", hs, w2) + b2[0]


# ------------------------------- params -----------------------------------
def init_params(key):
    ks = jax.random.split(key, 8)
    scale = 0.1
    # Weights stored as (in_features, out_features) == PyTorch weight.T
    w1 = scale * jax.random.normal(ks[0], (IN_DIM, W0), jnp.float32)
    b1 = scale * jax.random.normal(ks[1], (1, W0), jnp.float32)
    wih = scale * jax.random.normal(ks[2], (W0, HID), jnp.float32)
    bih = scale * jax.random.normal(ks[3], (1, HID), jnp.float32)
    whh = scale * jax.random.normal(ks[4], (HID, HID), jnp.float32)
    bhh = scale * jax.random.normal(ks[5], (1, HID), jnp.float32)
    w2 = scale * jax.random.normal(ks[6], (HID, OUT_DIM), jnp.float32)
    b2 = scale * jax.random.normal(ks[7], (1, OUT_DIM), jnp.float32)
    return (w1, b1, wih, bih, whh, bhh, w2, b2)


if __name__ == "__main__":
    key = jax.random.PRNGKey(0)
    k_x, k_p = jax.random.split(key)
    x = jax.random.normal(k_x, (BATCH, SEQ, IN_DIM), jnp.float32)
    params = init_params(k_p)
    kparams = prepare_kernel_params(params)

    fwd = jax.jit(functools.partial(rnn_head_forward, kparams=kparams))
    y = jax.block_until_ready(fwd(x))

    y_ref = rnn_head_reference(x, params)
    assert y.shape == (BATCH, SEQ, OUT_DIM), y.shape
    max_err = float(jnp.max(jnp.abs(y - y_ref)))
    assert jnp.allclose(y, y_ref, atol=1e-5, rtol=1e-5), max_err

    print("KERNEL_OK")
</pallas_src>

<mosaic_0001>
module attributes {stable_mosaic.version = 11 : i64} {
  func.func @_rnn_head_kernel(%arg0: i32, %arg1: memref<2x8x10xf32, #tpu.memory_space<vmem>>, %arg2: memref<10x32xf32, #tpu.memory_space<vmem>>, %arg3: memref<1x32xf32, #tpu.memory_space<vmem>>, %arg4: memref<32x32xf32, #tpu.memory_space<vmem>>, %arg5: memref<1x32xf32, #tpu.memory_space<vmem>>, %arg6: memref<32x32xf32, #tpu.memory_space<vmem>>, %arg7: memref<32x10xf32, #tpu.memory_space<vmem>>, %arg8: memref<1x10xf32, #tpu.memory_space<vmem>>, %arg9: memref<2x8x10xf32, #tpu.memory_space<vmem>>) attributes {dimension_semantics = [#tpu.dimension_semantics<parallel>], iteration_bounds = array<i64: 1>, scalar_prefetch = 0 : i64, scratch_operands = 0 : i64, tpu.core_type = #tpu.core_type<tc>, window_params = [{transform_indices = @transform_0, window_bounds = array<i64: 2, 8, 10>}, {pipeline_mode = #tpu.pipeline_mode<synchronous>, transform_indices = @transform_1, window_bounds = array<i64: 10, 32>}, {pipeline_mode = #tpu.pipeline_mode<synchronous>, transform_indices = @transform_2, window_bounds = array<i64: 1, 32>}, {pipeline_mode = #tpu.pipeline_mode<synchronous>, transform_indices = @transform_3, window_bounds = array<i64: 32, 32>}, {pipeline_mode = #tpu.pipeline_mode<synchronous>, transform_indices = @transform_4, window_bounds = array<i64: 1, 32>}, {pipeline_mode = #tpu.pipeline_mode<synchronous>, transform_indices = @transform_5, window_bounds = array<i64: 32, 32>}, {pipeline_mode = #tpu.pipeline_mode<synchronous>, transform_indices = @transform_6, window_bounds = array<i64: 32, 10>}, {pipeline_mode = #tpu.pipeline_mode<synchronous>, transform_indices = @transform_7, window_bounds = array<i64: 1, 10>}, {transform_indices = @transform_8, window_bounds = array<i64: 2, 8, 10>}]} {
    %c0 = arith.constant 0 : index
    %c0_0 = arith.constant 0 : index
    %c0_1 = arith.constant 0 : index
    %0 = vector.load %arg1[%c0, %c0_0, %c0_1] : memref<2x8x10xf32, #tpu.memory_space<vmem>>, vector<2x8x10xf32>
    %1 = vector.shape_cast %0 : vector<2x8x10xf32> to vector<16x10xf32>
    %c0_2 = arith.constant 0 : index
    %c0_3 = arith.constant 0 : index
    %2 = vector.load %arg2[%c0_2, %c0_3] : memref<10x32xf32, #tpu.memory_space<vmem>>, vector<10x32xf32>
    %cst = arith.constant dense<0.000000e+00> : vector<16x32xf32>
    %3 = tpu.matmul %1, %2, %cst {dimension_numbers = #tpu.dot_dimension_numbers<[1], [0], [0], [1], [0, 0, 1, 1], [], []>} : vector<16x10xf32>, vector<10x32xf32>, vector<16x32xf32> -> vector<16x32xf32>
    %c0_4 = arith.constant 0 : index
    %c0_5 = arith.constant 0 : index
    %4 = vector.load %arg3[%c0_4, %c0_5] : memref<1x32xf32, #tpu.memory_space<vmem>>, vector<1x32xf32>
    %5 = vector.broadcast %4 : vector<1x32xf32> to vector<16x32xf32>
    %6 = arith.addf %3, %5 : vector<16x32xf32>
    %cst_6 = arith.constant 0.000000e+00 : f32
    %7 = vector.broadcast %cst_6 : f32 to vector<16x32xf32>
    %8 = arith.maximumf %6, %7 : vector<16x32xf32>
    %c0_7 = arith.constant 0 : index
    %c0_8 = arith.constant 0 : index
    %9 = vector.load %arg4[%c0_7, %c0_8] : memref<32x32xf32, #tpu.memory_space<vmem>>, vector<32x32xf32>
    %cst_9 = arith.constant dense<0.000000e+00> : vector<16x32xf32>
    %10 = tpu.matmul %8, %9, %cst_9 {dimension_numbers = #tpu.dot_dimension_numbers<[1], [0], [0], [1], [0, 0, 1, 1], [], []>} : vector<16x32xf32>, vector<32x32xf32>, vector<16x32xf32> -> vector<16x32xf32>
    %c0_10 = arith.constant 0 : index
    %c0_11 = arith.constant 0 : index
    %11 = vector.load %arg5[%c0_10, %c0_11] : memref<1x32xf32, #tpu.memory_space<vmem>>, vector<1x32xf32>
    %12 = vector.broadcast %11 : vector<1x32xf32> to vector<16x32xf32>
    %13 = arith.addf %10, %12 : vector<16x32xf32>
    %14 = vector.shape_cast %13 : vector<16x32xf32> to vector<2x8x32xf32>
    %c0_12 = arith.constant 0 : index
    %c0_13 = arith.constant 0 : index
    %15 = vector.load %arg6[%c0_12, %c0_13] : memref<32x32xf32, #tpu.memory_space<vmem>>, vector<32x32xf32>
    %c0_14 = arith.constant 0 : index
    %c0_15 = arith.constant 0 : index
    %16 = vector.load %arg7[%c0_14, %c0_15] : memref<32x10xf32, #tpu.memory_space<vmem>>, vector<32x10xf32>
    %c0_16 = arith.constant 0 : index
    %c0_17 = arith.constant 0 : index
    %17 = vector.load %arg8[%c0_16, %c0_17] : memref<1x10xf32, #tpu.memory_space<vmem>>, vector<1x10xf32>
    %cst_18 = arith.constant 0.000000e+00 : f32
    %18 = vector.broadcast %cst_18 : f32 to vector<2x32xf32>
    %19 = vector.extract_strided_slice %14 {offsets = [0, 0, 0], sizes = [2, 1, 32], strides = [1, 1, 1]} : vector<2x8x32xf32> to vector<2x1x32xf32>
    %20 = vector.shape_cast %19 : vector<2x1x32xf32> to vector<2x32xf32>
    %cst_19 = arith.constant dense<0.000000e+00> : vector<2x32xf32>
    %21 = tpu.matmul %18, %15, %cst_19 {dimension_numbers = #tpu.dot_dimension_numbers<[1], [0], [0], [1], [0, 0, 1, 1], [], []>} : vector<2x32xf32>, vector<32x32xf32>, vector<2x32xf32> -> vector<2x32xf32>
    %22 = arith.addf %20, %21 : vector<2x32xf32>
    %23 = math.tanh %22 : vector<2x32xf32>
    %cst_20 = arith.constant dense<0.000000e+00> : vector<2x10xf32>
    %24 = tpu.matmul %23, %16, %cst_20 {dimension_numbers = #tpu.dot_dimension_numbers<[1], [0], [0], [1], [0, 0, 1, 1], [], []>} : vector<2x32xf32>, vector<32x10xf32>, vector<2x10xf32> -> vector<2x10xf32>
    %25 = vector.broadcast %17 : vector<1x10xf32> to vector<2x10xf32>
    %26 = arith.addf %24, %25 : vector<2x10xf32>
    %c0_21 = arith.constant 0 : index
    %c0_22 = arith.constant 0 : index
    %c0_23 = arith.constant 0 : index
    %27 = vector.load %arg9[%c0_21, %c0_22, %c0_23] : memref<2x8x10xf32, #tpu.memory_space<vmem>>, vector<2x1x10xf32>
    %28 = vector.shape_cast %27 : vector<2x1x10xf32> to vector<2x10xf32>
    %29 = vector.shape_cast %26 : vector<2x10xf32> to vector<2x1x10xf32>
    tpu.vector_store %arg9[%c0_21, %c0_22, %c0_23], %29 {strides = array<i32>} : memref<2x8x10xf32, #tpu.memory_space<vmem>>, vector<2x1x10xf32>,
    %30 = vector.extract_strided_slice %14 {offsets = [0, 1, 0], sizes = [2, 1, 32], strides = [1, 1, 1]} : vector<2x8x32xf32> to vector<2x1x32xf32>
    %31 = vector.shape_cast %30 : vector<2x1x32xf32> to vector<2x32xf32>
    %cst_24 = arith.constant dense<0.000000e+00> : vector<2x32xf32>
    %32 = tpu.matmul %23, %15, %cst_24 {dimension_numbers = #tpu.dot_dimension_numbers<[1], [0], [0], [1], [0, 0, 1, 1], [], []>} : vector<2x32xf32>, vector<32x32xf32>, vector<2x32xf32> -> vector<2x32xf32>
    %33 = arith.addf %31, %32 : vector<2x32xf32>
    %34 = math.tanh %33 : vector<2x32xf32>
    %cst_25 = arith.constant dense<0.000000e+00> : vector<2x10xf32>
    %35 = tpu.matmul %34, %16, %cst_25 {dimension_numbers = #tpu.dot_dimension_numbers<[1], [0], [0], [1], [0, 0, 1, 1], [], []>} : vector<2x32xf32>, vector<32x10xf32>, vector<2x10xf32> -> vector<2x10xf32>
    %36 = vector.broadcast %17 : vector<1x10xf32> to vector<2x10xf32>
    %37 = arith.addf %35, %36 : vector<2x10xf32>
    %c0_26 = arith.constant 0 : index
    %c1 = arith.constant 1 : index
    %c0_27 = arith.constant 0 : index
    %38 = vector.load %arg9[%c0_26, %c1, %c0_27] : memref<2x8x10xf32, #tpu.memory_space<vmem>>, vector<2x1x10xf32>
    %39 = vector.shape_cast %38 : vector<2x1x10xf32> to vector<2x10xf32>
    %40 = vector.shape_cast %37 : vector<2x10xf32> to vector<2x1x10xf32>
    tpu.vector_store %arg9[%c0_26, %c1, %c0_27], %40 {strides = array<i32>} : memref<2x8x10xf32, #tpu.memory_space<vmem>>, vector<2x1x10xf32>,
    %41 = vector.extract_strided_slice %14 {offsets = [0, 2, 0], sizes = [2, 1, 32], strides = [1, 1, 1]} : vector<2x8x32xf32> to vector<2x1x32xf32>
    %42 = vector.shape_cast %41 : vector<2x1x32xf32> to vector<2x32xf32>
    %cst_28 = arith.constant dense<0.000000e+00> : vector<2x32xf32>
    %43 = tpu.matmul %34, %15, %cst_28 {dimension_numbers = #tpu.dot_dimension_numbers<[1], [0], [0], [1], [0, 0, 1, 1], [], []>} : vector<2x32xf32>, vector<32x32xf32>, vector<2x32xf32> -> vector<2x32xf32>
    %44 = arith.addf %42, %43 : vector<2x32xf32>
    %45 = math.tanh %44 : vector<2x32xf32>
    %cst_29 = arith.constant dense<0.000000e+00> : vector<2x10xf32>
    %46 = tpu.matmul %45, %16, %cst_29 {dimension_numbers = #tpu.dot_dimension_numbers<[1], [0], [0], [1], [0, 0, 1, 1], [], []>} : vector<2x32xf32>, vector<32x10xf32>, vector<2x10xf32> -> vector<2x10xf32>
    %47 = vector.broadcast %17 : vector<1x10xf32> to vector<2x10xf32>
    %48 = arith.addf %46, %47 : vector<2x10xf32>
    %c0_30 = arith.constant 0 : index
    %c2 = arith.constant 2 : index
    %c0_31 = arith.constant 0 : index
    %49 = vector.load %arg9[%c0_30, %c2, %c0_31] : memref<2x8x10xf32, #tpu.memory_space<vmem>>, vector<2x1x10xf32>
    %50 = vector.shape_cast %49 : vector<2x1x10xf32> to vector<2x10xf32>
    %51 = vector.shape_cast %48 : vector<2x10xf32> to vector<2x1x10xf32>
    tpu.vector_store %arg9[%c0_30, %c2, %c0_31], %51 {strides = array<i32>} : memref<2x8x10xf32, #tpu.memory_space<vmem>>, vector<2x1x10xf32>,
    %52 = vector.extract_strided_slice %14 {offsets = [0, 3, 0], sizes = [2, 1, 32], strides = [1, 1, 1]} : vector<2x8x32xf32> to vector<2x1x32xf32>
    %53 = vector.shape_cast %52 : vector<2x1x32xf32> to vector<2x32xf32>
    %cst_32 = arith.constant dense<0.000000e+00> : vector<2x32xf32>
    %54 = tpu.matmul %45, %15, %cst_32 {dimension_numbers = #tpu.dot_dimension_numbers<[1], [0], [0], [1], [0, 0, 1, 1], [], []>} : vector<2x32xf32>, vector<32x32xf32>, vector<2x32xf32> -> vector<2x32xf32>
    %55 = arith.addf %53, %54 : vector<2x32xf32>
    %56 = math.tanh %55 : vector<2x32xf32>
    %cst_33 = arith.constant dense<0.000000e+00> : vector<2x10xf32>
    %57 = tpu.matmul %56, %16, %cst_33 {dimension_numbers = #tpu.dot_dimension_numbers<[1], [0], [0], [1], [0, 0, 1, 1], [], []>} : vector<2x32xf32>, vector<32x10xf32>, vector<2x10xf32> -> vector<2x10xf32>
    %58 = vector.broadcast %17 : vector<1x10xf32> to vector<2x10xf32>
    %59 = arith.addf %57, %58 : vector<2x10xf32>
    %c0_34 = arith.constant 0 : index
    %c3 = arith.constant 3 : index
    %c0_35 = arith.constant 0 : index
    %60 = vector.load %arg9[%c0_34, %c3, %c0_35] : memref<2x8x10xf32, #tpu.memory_space<vmem>>, vector<2x1x10xf32>
    %61 = vector.shape_cast %60 : vector<2x1x10xf32> to vector<2x10xf32>
    %62 = vector.shape_cast %59 : vector<2x10xf32> to vector<2x1x10xf32>
    tpu.vector_store %arg9[%c0_34, %c3, %c0_35], %62 {strides = array<i32>} : memref<2x8x10xf32, #tpu.memory_space<vmem>>, vector<2x1x10xf32>,
    %63 = vector.extract_strided_slice %14 {offsets = [0, 4, 0], sizes = [2, 1, 32], strides = [1, 1, 1]} : vector<2x8x32xf32> to vector<2x1x32xf32>
    %64 = vector.shape_cast %63 : vector<2x1x32xf32> to vector<2x32xf32>
    %cst_36 = arith.constant dense<0.000000e+00> : vector<2x32xf32>
    %65 = tpu.matmul %56, %15, %cst_36 {dimension_numbers = #tpu.dot_dimension_numbers<[1], [0], [0], [1], [0, 0, 1, 1], [], []>} : vector<2x32xf32>, vector<32x32xf32>, vector<2x32xf32> -> vector<2x32xf32>
    %66 = arith.addf %64, %65 : vector<2x32xf32>
    %67 = math.tanh %66 : vector<2x32xf32>
    %cst_37 = arith.constant dense<0.000000e+00> : vector<2x10xf32>
    %68 = tpu.matmul %67, %16, %cst_37 {dimension_numbers = #tpu.dot_dimension_numbers<[1], [0], [0], [1], [0, 0, 1, 1], [], []>} : vector<2x32xf32>, vector<32x10xf32>, vector<2x10xf32> -> vector<2x10xf32>
    %69 = vector.broadcast %17 : vector<1x10xf32> to vector<2x10xf32>
    %70 = arith.addf %68, %69 : vector<2x10xf32>
    %c0_38 = arith.constant 0 : index
    %c4 = arith.constant 4 : index
    %c0_39 = arith.constant 0 : index
    %71 = vector.load %arg9[%c0_38, %c4, %c0_39] : memref<2x8x10xf32, #tpu.memory_space<vmem>>, vector<2x1x10xf32>
    %72 = vector.shape_cast %71 : vector<2x1x10xf32> to vector<2x10xf32>
    %73 = vector.shape_cast %70 : vector<2x10xf32> to vector<2x1x10xf32>
    tpu.vector_store %arg9[%c0_38, %c4, %c0_39], %73 {strides = array<i32>} : memref<2x8x10xf32, #tpu.memory_space<vmem>>, vector<2x1x10xf32>,
    %74 = vector.extract_strided_slice %14 {offsets = [0, 5, 0], sizes = [2, 1, 32], strides = [1, 1, 1]} : vector<2x8x32xf32> to vector<2x1x32xf32>
    %75 = vector.shape_cast %74 : vector<2x1x32xf32> to vector<2x32xf32>
    %cst_40 = arith.constant dense<0.000000e+00> : vector<2x32xf32>
    %76 = tpu.matmul %67, %15, %cst_40 {dimension_numbers = #tpu.dot_dimension_numbers<[1], [0], [0], [1], [0, 0, 1, 1], [], []>} : vector<2x32xf32>, vector<32x32xf32>, vector<2x32xf32> -> vector<2x32xf32>
    %77 = arith.addf %75, %76 : vector<2x32xf32>
    %78 = math.tanh %77 : vector<2x32xf32>
    %cst_41 = arith.constant dense<0.000000e+00> : vector<2x10xf32>
    %79 = tpu.matmul %78, %16, %cst_41 {dimension_numbers = #tpu.dot_dimension_numbers<[1], [0], [0], [1], [0, 0, 1, 1], [], []>} : vector<2x32xf32>, vector<32x10xf32>, vector<2x10xf32> -> vector<2x10xf32>
    %80 = vector.broadcast %17 : vector<1x10xf32> to vector<2x10xf32>
    %81 = arith.addf %79, %80 : vector<2x10xf32>
    %c0_42 = arith.constant 0 : index
    %c5 = arith.constant 5 : index
    %c0_43 = arith.constant 0 : index
    %82 = vector.load %arg9[%c0_42, %c5, %c0_43] : memref<2x8x10xf32, #tpu.memory_space<vmem>>, vector<2x1x10xf32>
    %83 = vector.shape_cast %82 : vector<2x1x10xf32> to vector<2x10xf32>
    %84 = vector.shape_cast %81 : vector<2x10xf32> to vector<2x1x10xf32>
    tpu.vector_store %arg9[%c0_42, %c5, %c0_43], %84 {strides = array<i32>} : memref<2x8x10xf32, #tpu.memory_space<vmem>>, vector<2x1x10xf32>,
    %85 = vector.extract_strided_slice %14 {offsets = [0, 6, 0], sizes = [2, 1, 32], strides = [1, 1, 1]} : vector<2x8x32xf32> to vector<2x1x32xf32>
    %86 = vector.shape_cast %85 : vector<2x1x32xf32> to vector<2x32xf32>
    %cst_44 = arith.constant dense<0.000000e+00> : vector<2x32xf32>
    %87 = tpu.matmul %78, %15, %cst_44 {dimension_numbers = #tpu.dot_dimension_numbers<[1], [0], [0], [1], [0, 0, 1, 1], [], []>} : vector<2x32xf32>, vector<32x32xf32>, vector<2x32xf32> -> vector<2x32xf32>
    %88 = arith.addf %86, %87 : vector<2x32xf32>
    %89 = math.tanh %88 : vector<2x32xf32>
    %cst_45 = arith.constant dense<0.000000e+00> : vector<2x10xf32>
    %90 = tpu.matmul %89, %16, %cst_45 {dimension_numbers = #tpu.dot_dimension_numbers<[1], [0], [0], [1], [0, 0, 1, 1], [], []>} : vector<2x32xf32>, vector<32x10xf32>, vector<2x10xf32> -> vector<2x10xf32>
    %91 = vector.broadcast %17 : vector<1x10xf32> to vector<2x10xf32>
    %92 = arith.addf %90, %91 : vector<2x10xf32>
    %c0_46 = arith.constant 0 : index
    %c6 = arith.constant 6 : index
    %c0_47 = arith.constant 0 : index
    %93 = vector.load %arg9[%c0_46, %c6, %c0_47] : memref<2x8x10xf32, #tpu.memory_space<vmem>>, vector<2x1x10xf32>
    %94 = vector.shape_cast %93 : vector<2x1x10xf32> to vector<2x10xf32>
    %95 = vector.shape_cast %92 : vector<2x10xf32> to vector<2x1x10xf32>
    tpu.vector_store %arg9[%c0_46, %c6, %c0_47], %95 {strides = array<i32>} : memref<2x8x10xf32, #tpu.memory_space<vmem>>, vector<2x1x10xf32>,
    %96 = vector.extract_strided_slice %14 {offsets = [0, 7, 0], sizes = [2, 1, 32], strides = [1, 1, 1]} : vector<2x8x32xf32> to vector<2x1x32xf32>
    %97 = vector.shape_cast %96 : vector<2x1x32xf32> to vector<2x32xf32>
    %cst_48 = arith.constant dense<0.000000e+00> : vector<2x32xf32>
    %98 = tpu.matmul %89, %15, %cst_48 {dimension_numbers = #tpu.dot_dimension_numbers<[1], [0], [0], [1], [0, 0, 1, 1], [], []>} : vector<2x32xf32>, vector<32x32xf32>, vector<2x32xf32> -> vector<2x32xf32>
    %99 = arith.addf %97, %98 : vector<2x32xf32>
    %100 = math.tanh %99 : vector<2x32xf32>
    %cst_49 = arith.constant dense<0.000000e+00> : vector<2x10xf32>
    %101 = tpu.matmul %100, %16, %cst_49 {dimension_numbers = #tpu.dot_dimension_numbers<[1], [0], [0], [1], [0, 0, 1, 1], [], []>} : vector<2x32xf32>, vector<32x10xf32>, vector<2x10xf32> -> vector<2x10xf32>
    %102 = vector.broadcast %17 : vector<1x10xf32> to vector<2x10xf32>
    %103 = arith.addf %101, %102 : vector<2x10xf32>
    %c0_50 = arith.constant 0 : index
    %c7 = arith.constant 7 : index
    %c0_51 = arith.constant 0 : index
    %104 = vector.load %arg9[%c0_50, %c7, %c0_51] : memref<2x8x10xf32, #tpu.memory_space<vmem>>, vector<2x1x10xf32>
    %105 = vector.shape_cast %104 : vector<2x1x10xf32> to vector<2x10xf32>
    %106 = vector.shape_cast %103 : vector<2x10xf32> to vector<2x1x10xf32>
    tpu.vector_store %arg9[%c0_50, %c7, %c0_51], %106 {strides = array<i32>} : memref<2x8x10xf32, #tpu.memory_space<vmem>>, vector<2x1x10xf32>,
    return
  }
  func.func @transform_0(%arg0: i32) -> (i32, i32, i32) {
    %c0_i32 = arith.constant 0 : i32
    %c0_i32_0 = arith.constant 0 : i32
    %c0_i32_1 = arith.constant 0 : i32
    return %arg0, %c0_i32, %c0_i32_0 : i32, i32, i32
  }
  func.func @transform_1(%arg0: i32) -> (i32, i32) {
    %c0_i32 = arith.constant 0 : i32
    %c0_i32_0 = arith.constant 0 : i32
    %c0_i32_1 = arith.constant 0 : i32
    return %c0_i32, %c0_i32_0 : i32, i32
  }
  func.func @transform_2(%arg0: i32) -> (i32, i32) {
    %c0_i32 = arith.constant 0 : i32
    %c0_i32_0 = arith.constant 0 : i32
    %c0_i32_1 = arith.constant 0 : i32
    return %c0_i32, %c0_i32_0 : i32, i32
  }
  func.func @transform_3(%arg0: i32) -> (i32, i32) {
    %c0_i32 = arith.constant 0 : i32
    %c0_i32_0 = arith.constant 0 : i32
    %c0_i32_1 = arith.constant 0 : i32
    return %c0_i32, %c0_i32_0 : i32, i32
  }
  func.func @transform_4(%arg0: i32) -> (i32, i32) {
    %c0_i32 = arith.constant 0 : i32
    %c0_i32_0 = arith.constant 0 : i32
    %c0_i32_1 = arith.constant 0 : i32
    return %c0_i32, %c0_i32_0 : i32, i32
  }
  func.func @transform_5(%arg0: i32) -> (i32, i32) {
    %c0_i32 = arith.constant 0 : i32
    %c0_i32_0 = arith.constant 0 : i32
    %c0_i32_1 = arith.constant 0 : i32
    return %c0_i32, %c0_i32_0 : i32, i32
  }
  func.func @transform_6(%arg0: i32) -> (i32, i32) {
    %c0_i32 = arith.constant 0 : i32
    %c0_i32_0 = arith.constant 0 : i32
    %c0_i32_1 = arith.constant 0 : i32
    return %c0_i32, %c0_i32_0 : i32, i32
  }
  func.func @transform_7(%arg0: i32) -> (i32, i32) {
    %c0_i32 = arith.constant 0 : i32
    %c0_i32_0 = arith.constant 0 : i32
    %c0_i32_1 = arith.constant 0 : i32
    return %c0_i32, %c0_i32_0 : i32, i32
  }
  func.func @transform_8(%arg0: i32) -> (i32, i32, i32) {
    %c0_i32 = arith.constant 0 : i32
    %c0_i32_0 = arith.constant 0 : i32
    %c0_i32_1 = arith.constant 0 : i32
    return %arg0, %c0_i32, %c0_i32_0 : i32, i32, i32
  }
}

</mosaic_0001>

<llo_original>
// kernel: rnn_head_forward.1
$region0: #{rnn_head_forward.1}
  #allocation0 [shape = 'u32[]', space=smem, size = 0x4, offset = 0x4, fixed_abs, tag = 'smem constant byte address 0x4 - core index']
  #allocation1 [shape = 'u32[144,128]{1,0:T(1,128)}', space=vmem, size = 0x12000, scoped, tag = 'internal scratch']
  %s0 = inlined_call_operand.hbm [shape: f32[2,8,10], index: 0, kind: input, shape index: {}]
  %s1 = inlined_call_operand.hbm [shape: f32[10,32], index: 1, kind: input, shape index: {}]
  %s2 = inlined_call_operand.vmem [shape: f32[1,32], index: 2, kind: input, shape index: {}]
  %s3 = inlined_call_operand.hbm [shape: f32[32,32], index: 3, kind: input, shape index: {}]
  %s4 = inlined_call_operand.vmem [shape: f32[1,32], index: 4, kind: input, shape index: {}]
  %s5 = inlined_call_operand.hbm [shape: f32[32,32], index: 5, kind: input, shape index: {}]
  %s6 = inlined_call_operand.hbm [shape: f32[32,10], index: 6, kind: input, shape index: {}]
  %s7 = inlined_call_operand.vmem [shape: f32[1,10], index: 7, kind: input, shape index: {}]
  %s8 = inlined_call_operand.hbm [shape: f32[2,8,10], index: 8, kind: output, shape index: {}]
  %s9 = sld [smem:[#allocation0]]
  $region62: #{rnn_head_forward.1} parent=0
    _
  %s11 = ssub.s32 1, %s9
  %s12 = scalar_select 0, %s11, %s9
  $region1: #{rnn_head_forward.1} parent=0
    #allocation2 [shape = 'u8[8192]{0}', space=vmem, size = 0x2000, scoped, tag = 'input window, operand 0, single buffered']
    #allocation3 [shape = 's32[1]{0}', space=sflag, size = 0x4, scoped, tag = 'scoped memory for rnn_head_forward.1']
    #allocation4 [shape = 's32[1]{0}', space=sflag, size = 0x4, scoped, tag = 'scoped memory for rnn_head_forward.1']
    #allocation5 [shape = 'u8[8192]{0}', space=vmem, size = 0x2000, scoped, tag = 'input window, operand 1, single buffered']
    #allocation6 [shape = 's32[1]{0}', space=sflag, size = 0x4, scoped, tag = 'scoped memory for rnn_head_forward.1']
    #allocation7 [shape = 'u8[16384]{0}', space=vmem, size = 0x4000, scoped, tag = 'input window, operand 3, single buffered']
    #allocation8 [shape = 'u8[16384]{0}', space=vmem, size = 0x4000, scoped, tag = 'input window, operand 5, single buffered']
    #allocation9 [shape = 's32[1]{0}', space=sflag, size = 0x4, scoped, tag = 'scoped memory for rnn_head_forward.1']
    #allocation10 [shape = 'u8[16384]{0}', space=vmem, size = 0x4000, scoped, tag = 'input window, operand 6, single buffered']
    #allocation11 [shape = 'u8[8192]{0}', space=vmem, size = 0x2000, scoped, tag = 'output window, operand 0, single buffered']
    %13 = vsyncpa [#allocation3], 0
    %14 = vsyncpa [#allocation6], 0
    %15 = vsyncpa [#allocation9], 0
    %16 = vsyncpa [#allocation4], 0
    // Predicated region
    $region2: #{rnn_head_forward.1} parent=1 // pred_check
      _
    $region3: #{rnn_head_forward.1} parent=1 // pred_check_branch
      %18 = sbr.rel (0) target = $region5
    $region4: #{rnn_head_forward.1} parent=1 // pred_region
      %s20 = ssub.s32 256, 256
      %21 = vsyncadd [#allocation3], %s20
      %s22 = sshll.u32 [#allocation2], 4
      %s23 = int_to_ptr.vmem [resolvable:$true] %s22
      %28 = dma.hbm_to_vmem [thread:$0]  %s0, 256, %s23, [#allocation3], 128, 128, 8
    $region5: #{rnn_head_forward.1} parent=1 // pred_fallthru
      _
    // Predicated region
    $region6: #{rnn_head_forward.1} parent=1 // pred_check
      _
    $region7: #{rnn_head_forward.1} parent=1 // pred_check_branch
      %30 = sbr.rel (0) target = $region9
    $region8: #{rnn_head_forward.1} parent=1 // pred_region
      %s32 = ssub.s32 256, 256
      %33 = vsyncadd [#allocation6], %s32
      %s34 = sshll.u32 [#allocation5], 4
      %s35 = int_to_ptr.vmem [resolvable:$true] %s34
      %40 = dma.hbm_to_vmem [thread:$0]  %s1, 256, %s35, [#allocation6], 128, 128, 8
    $region9: #{rnn_head_forward.1} parent=1 // pred_fallthru
      _
    // Predicated region
    $region10: #{rnn_head_forward.1} parent=1 // pred_check
      _
    $region11: #{rnn_head_forward.1} parent=1 // pred_check_branch
      %42 = sbr.rel (0) target = $region13
    $region12: #{rnn_head_forward.1} parent=1 // pred_region
      _
    $region13: #{rnn_head_forward.1} parent=1 // pred_fallthru
      _
    // Predicated region
    $region14: #{rnn_head_forward.1} parent=1 // pred_check
      _
    $region15: #{rnn_head_forward.1} parent=1 // pred_check_branch
      %44 = sbr.rel (0) target = $region17
    $region16: #{rnn_head_forward.1} parent=1 // pred_region
      %s46 = ssub.s32 512, 512
      %47 = vsyncadd [#allocation6], %s46
      %s48 = sshll.u32 [#allocation7], 4
      %s49 = int_to_ptr.vmem [resolvable:$true] %s48
      %54 = dma.hbm_to_vmem [thread:$0]  %s3, 512, %s49, [#allocation6], 128, 128, 8
    $region17: #{rnn_head_forward.1} parent=1 // pred_fallthru
      _
    // Predicated region
    $region18: #{rnn_head_forward.1} parent=1 // pred_check
      _
    $region19: #{rnn_head_forward.1} parent=1 // pred_check_branch
      %56 = sbr.rel (0) target = $region21
    $region20: #{rnn_head_forward.1} parent=1 // pred_region
      _
    $region21: #{rnn_head_forward.1} parent=1 // pred_fallthru
      _
    // Predicated region
    $region22: #{rnn_head_forward.1} parent=1 // pred_check
      _
    $region23: #{rnn_head_forward.1} parent=1 // pred_check_branch
      %58 = sbr.rel (0) target = $region25
    $region24: #{rnn_head_forward.1} parent=1 // pred_region
      %s60 = ssub.s32 512, 512
      %61 = vsyncadd [#allocation9], %s60
      %s62 = sshll.u32 [#allocation8], 4
      %s63 = int_to_ptr.vmem [resolvable:$true] %s62
      %68 = dma.hbm_to_vmem [thread:$0]  %s5, 512, %s63, [#allocation9], 128, 128, 8
    $region25: #{rnn_head_forward.1} parent=1 // pred_fallthru
      _
    // Predicated region
    $region26: #{rnn_head_forward.1} parent=1 // pred_check
      _
    $region27: #{rnn_head_forward.1} parent=1 // pred_check_branch
      %70 = sbr.rel (0) target = $region29
    $region28: #{rnn_head_forward.1} parent=1 // pred_region
      %s72 = ssub.s32 512, 512
      %73 = vsyncadd [#allocation9], %s72
      %s74 = sshll.u32 [#allocation10], 4
      %s75 = int_to_ptr.vmem [resolvable:$true] %s74
      %80 = dma.hbm_to_vmem [thread:$0]  %s6, 512, %s75, [#allocation9], 128, 128, 8
    $region29: #{rnn_head_forward.1} parent=1 // pred_fallthru
      _
    // Predicated region
    $region30: #{rnn_head_forward.1} parent=1 // pred_check
      _
    $region31: #{rnn_head_forward.1} parent=1 // pred_check_branch
      %82 = sbr.rel (0) target = $region33
    $region32: #{rnn_head_forward.1} parent=1 // pred_region
      _
    $region33: #{rnn_head_forward.1} parent=1 // pred_fallthru
      _
    // Predicated region
    $region34: #{rnn_head_forward.1} parent=1 // pred_check
      _
    $region35: #{rnn_head_forward.1} parent=1 // pred_check_branch
      %84 = sbr.rel (0) target = $region37
    $region36: #{rnn_head_forward.1} parent=1 // pred_region
      %85 = dma.done [#allocation3], 256
    $region37: #{rnn_head_forward.1} parent=1 // pred_fallthru
      _
    // Predicated region
    $region38: #{rnn_head_forward.1} parent=1 // pred_check
      _
    $region39: #{rnn_head_forward.1} parent=1 // pred_check_branch
      %87 = sbr.rel (0) target = $region41
    $region40: #{rnn_head_forward.1} parent=1 // pred_region
      %88 = dma.done [#allocation6], 256
    $region41: #{rnn_head_forward.1} parent=1 // pred_fallthru
      _
    // Predicated region
    $region42: #{rnn_head_forward.1} parent=1 // pred_check
      _
    $region43: #{rnn_head_forward.1} parent=1 // pred_check_branch
      %90 = sbr.rel (0) target = $region45
    $region44: #{rnn_head_forward.1} parent=1 // pred_region
      %91 = dma.done [#allocation6], 512
    $region45: #{rnn_head_forward.1} parent=1 // pred_fallthru
      _
    // Predicated region
    $region46: #{rnn_head_forward.1} parent=1 // pred_check
      _
    $region47: #{rnn_head_forward.1} parent=1 // pred_check_branch
      %93 = sbr.rel (0) target = $region49
    $region48: #{rnn_head_forward.1} parent=1 // pred_region
      %94 = dma.done [#allocation9], 512
    $region49: #{rnn_head_forward.1} parent=1 // pred_fallthru
      _
    // Predicated region
    $region50: #{rnn_head_forward.1} parent=1 // pred_check
      _
    $region51: #{rnn_head_forward.1} parent=1 // pred_check_branch
      %96 = sbr.rel (0) target = $region53
    $region52: #{rnn_head_forward.1} parent=1 // pred_region
      %97 = dma.done [#allocation9], 512
    $region53: #{rnn_head_forward.1} parent=1 // pred_fallthru
      _
    %v98 = vld [vmem:[#allocation2] sm:$0xff]
    %v99 = vld [vmem:[#allocation2 + $0x8] sm:$0xff]
    %v100 = vld [vmem:[#allocation5] sm:$0xff]
    %v101 = vld [vmem:[#allocation5 + $0x8] sm:$0x3]
    %v102 = vld [vmem:[%s2] sm:$0x1]
    %v104 = vlaneseq
    %v105 = vshrl.u32 %v104, 7
    %v106 = vsub.s32 0, %v105
    %v107 = vrot.slane %v102, %v106
    %vm109 = vcmask 80896
    %v111 = vsel %vm109, %v98, 0
    %v114 = vsel %vm109, %v99, 0
    %vm116 = vcmask 1041408
    %v118 = vsel %vm116, %v101, 0
    %120 = vmatprep.subr.mxu0 0.0
    %121 = vmatpush1.msra.mxu0 %v100
    %122 = vmatprep.subr.mxu0 0.0
    %123 = vmatpush1.msra.mxu0 %v118
    %124 = vmatprep.subr.mxu0 0.0
    %125 = vmatpush1.msra.mxu0 0.0
    %126 = vmatprep.subr.mxu0 0.0
    %127 = vmatpush1.msra.mxu0 0.0
    %128 = vmatprep.subr.mxu0 0.0
    %129 = vmatpush1.msra.mxu0 0.0
    %130 = vmatprep.subr.mxu0 0.0
    %131 = vmatpush1.msra.mxu0 0.0
    %132 = vmatprep.subr.mxu0 0.0
    %133 = vmatpush1.msra.mxu0 0.0
    %134 = vmatprep.subr.mxu0 0.0
    %135 = vmatpush1.msra.mxu0 0.0
    %136 = vmatprep.subr.mxu0 0.0
    %137 = vmatpush1.msra.mxu0 0.0
    %138 = vmatprep.subr.mxu0 0.0
    %139 = vmatpush1.msra.mxu0 0.0
    %140 = vmatprep.subr.mxu0 0.0
    %141 = vmatpush1.msra.mxu0 0.0
    %142 = vmatprep.subr.mxu0 0.0
    %143 = vmatpush1.msra.mxu0 0.0
    %144 = vmatprep.subr.mxu0 0.0
    %145 = vmatpush1.msra.mxu0 0.0
    %146 = vmatprep.subr.mxu0 0.0
    %147 = vmatpush1.msra.mxu0 0.0
    %148 = vmatprep.subr.mxu0 0.0
    %149 = vmatpush1.msra.mxu0 0.0
    %150 = vmatprep.subr.mxu0 0.0
    %151 = vmatpush1.msra.mxu0 0.0
    %152 = vmatprep.subr.mxu0 0.0
    %153 = vmatpush1.msra.mxu0 0.0
    %154 = vmatprep.subr.mxu0 0.0
    %155 = vmatpush1.msra.mxu0 0.0
    %156 = vmatprep.subr.mxu0 0.0
    %157 = vmatpush1.msra.mxu0 0.0
    %158 = vmatprep.subr.mxu0 0.0
    %159 = vmatpush1.msra.mxu0 0.0
    %160 = vmatprep.subr.mxu0 0.0
    %161 = vmatpush1.msra.mxu0 0.0
    %162 = vmatprep.subr.mxu0 0.0
    %163 = vmatpush1.msra.mxu0 0.0
    %164 = vmatprep.subr.mxu0 0.0
    %165 = vmatpush1.msra.mxu0 0.0
    %166 = vmatprep.subr.mxu0 0.0
    %167 = vmatpush1.msra.mxu0 0.0
    %168 = vmatprep.subr.mxu0 0.0
    %169 = vmatpush1.msra.mxu0 0.0
    %170 = vmatprep.subr.mxu0 0.0
    %171 = vmatpush1.msra.mxu0 0.0
    %172 = vmatprep.subr.mxu0 0.0
    %173 = vmatpush1.msra.mxu0 0.0
    %174 = vmatprep.subr.mxu0 0.0
    %175 = vmatpush1.msra.mxu0 0.0
    %176 = vmatprep.subr.mxu0 0.0
    %177 = vmatpush1.msra.mxu0 0.0
    %178 = vmatprep.subr.mxu0 0.0
    %179 = vmatpush1.msra.mxu0 0.0
    %180 = vmatprep.subr.mxu0 0.0
    %181 = vmatpush1.msra.mxu0 0.0
    %182 = vmatprep.subr.mxu0 0.0
    %183 = vmatpush1.msra.mxu0 0.0
    %184 = vmatprep.mubr.f32.mxu0 0.0
    %185 = vmatmul.mubr.f32.gmra.mrb[0].mxu0 %v111
    %v186 = vpop.f32.mrb[0].mxu0
    %v187 = vadd.f32 %v107, %v186
    %v188 = vpop.f32.mrb[0].mxu0
    %189 = vmatprep.mubr.f32.mxu0 0.0
    %190 = vmatmul.mubr.f32.gmra.mrb[0].mxu0 %v114
    %v191 = vpop.f32.mrb[0].mxu0
    %v192 = vadd.f32 %v107, %v191
    %v193 = vpop.f32.mrb[0].mxu0
    %194 = vdwg.mxu0
    %v195 = vmax.f32 %v187, 0.0
    %v196 = vmax.f32 %v192, 0.0
    %v197 = vld [vmem:[#allocation7] sm:$0xff]
    %v198 = vld [vmem:[#allocation7 + $0x8] sm:$0xff]
    %v199 = vld [vmem:[#allocation7 + $0x10] sm:$0xff]
    %v200 = vld [vmem:[#allocation7 + $0x18] sm:$0xff]
    %v201 = vld [vmem:[%s4] sm:$0x1]
    %v203 = vlaneseq
    %v204 = vshrl.u32 %v203, 7
    %v205 = vsub.s32 0, %v204
    %v206 = vrot.slane %v201, %v205
    %vm208 = vcmask 261120
    %v210 = vsel %vm208, %v195, 0
    %v213 = vsel %vm208, %v196, 0
    %215 = vmatprep.subr.mxu0 0.0
    %216 = vmatpush1.msra.mxu0 %v197
    %217 = vmatprep.subr.mxu0 0.0
    %218 = vmatpush1.msra.mxu0 %v198
    %219 = vmatprep.subr.mxu0 0.0
    %220 = vmatpush1.msra.mxu0 %v199
    %221 = vmatprep.subr.mxu0 0.0
    %222 = vmatpush1.msra.mxu0 %v200
    %223 = vmatprep.subr.mxu0 0.0
    %224 = vmatpush1.msra.mxu0 0.0
    %225 = vmatprep.subr.mxu0 0.0
    %226 = vmatpush1.msra.mxu0 0.0
    %227 = vmatprep.subr.mxu0 0.0
    %228 = vmatpush1.msra.mxu0 0.0
    %229 = vmatprep.subr.mxu0 0.0
    %230 = vmatpush1.msra.mxu0 0.0
    %231 = vmatprep.subr.mxu0 0.0
    %232 = vmatpush1.msra.mxu0 0.0
    %233 = vmatprep.subr.mxu0 0.0
    %234 = vmatpush1.msra.mxu0 0.0
    %235 = vmatprep.subr.mxu0 0.0
    %236 = vmatpush1.msra.mxu0 0.0
    %237 = vmatprep.subr.mxu0 0.0
    %238 = vmatpush1.msra.mxu0 0.0
    %239 = vmatprep.subr.mxu0 0.0
    %240 = vmatpush1.msra.mxu0 0.0
    %241 = vmatprep.subr.mxu0 0.0
    %242 = vmatpush1.msra.mxu0 0.0
    %243 = vmatprep.subr.mxu0 0.0
    %244 = vmatpush1.msra.mxu0 0.0
    %245 = vmatprep.subr.mxu0 0.0
    %246 = vmatpush1.msra.mxu0 0.0
    %247 = vmatprep.subr.mxu0 0.0
    %248 = vmatpush1.msra.mxu0 0.0
    %249 = vmatprep.subr.mxu0 0.0
    %250 = vmatpush1.msra.mxu0 0.0
    %251 = vmatprep.subr.mxu0 0.0
    %252 = vmatpush1.msra.mxu0 0.0
    %253 = vmatprep.subr.mxu0 0.0
    %254 = vmatpush1.msra.mxu0 0.0
    %255 = vmatprep.subr.mxu0 0.0
    %256 = vmatpush1.msra.mxu0 0.0
    %257 = vmatprep.subr.mxu0 0.0
    %258 = vmatpush1.msra.mxu0 0.0
    %259 = vmatprep.subr.mxu0 0.0
    %260 = vmatpush1.msra.mxu0 0.0
    %261 = vmatprep.subr.mxu0 0.0
    %262 = vmatpush1.msra.mxu0 0.0
    %263 = vmatprep.subr.mxu0 0.0
    %264 = vmatpush1.msra.mxu0 0.0
    %265 = vmatprep.subr.mxu0 0.0
    %266 = vmatpush1.msra.mxu0 0.0
    %267 = vmatprep.subr.mxu0 0.0
    %268 = vmatpush1.msra.mxu0 0.0
    %269 = vmatprep.subr.mxu0 0.0
    %270 = vmatpush1.msra.mxu0 0.0
    %271 = vmatprep.subr.mxu0 0.0
    %272 = vmatpush1.msra.mxu0 0.0
    %273 = vmatprep.subr.mxu0 0.0
    %274 = vmatpush1.msra.mxu0 0.0
    %275 = vmatprep.subr.mxu0 0.0
    %276 = vmatpush1.msra.mxu0 0.0
    %277 = vmatprep.subr.mxu0 0.0
    %278 = vmatpush1.msra.mxu0 0.0
    %279 = vmatprep.mubr.f32.mxu0 0.0
    %280 = vmatmul.mubr.f32.gmra.mrb[0].mxu0 %v210
    %v281 = vpop.f32.mrb[0].mxu0
    %v282 = vadd.f32 %v206, %v281
    %v283 = vpop.f32.mrb[0].mxu0
    %284 = vmatprep.mubr.f32.mxu0 0.0
    %285 = vmatmul.mubr.f32.gmra.mrb[0].mxu0 %v213
    %v286 = vpop.f32.mrb[0].mxu0
    %v287 = vadd.f32 %v206, %v286
    %v288 = vpop.f32.mrb[0].mxu0
    %289 = vdwg.mxu0
    %v290 = vld [vmem:[#allocation8] sm:$0xff]
    %v291 = vld [vmem:[#allocation8 + $0x8] sm:$0xff]
    %v292 = vld [vmem:[#allocation8 + $0x10] sm:$0xff]
    %v293 = vld [vmem:[#allocation8 + $0x18] sm:$0xff]
    %v294 = vld [vmem:[#allocation10] sm:$0xff]
    %v295 = vld [vmem:[#allocation10 + $0x8] sm:$0xff]
    %v296 = vld [vmem:[#allocation10 + $0x10] sm:$0xff]
    %v297 = vld [vmem:[#allocation10 + $0x18] sm:$0xff]
    %v298 = vld [vmem:[%s7] sm:$0x1]
    %v300 = vsel %vm208, 0.0, 0
    %302 = vmatprep.subr.mxu0 0.0
    %303 = vmatpush1.msra.mxu0 %v290
    %304 = vmatprep.subr.mxu0 0.0
    %305 = vmatpush1.msra.mxu0 %v291
    %306 = vmatprep.subr.mxu0 0.0
    %307 = vmatpush1.msra.mxu0 %v292
    %308 = vmatprep.subr.mxu0 0.0
    %309 = vmatpush1.msra.mxu0 %v293
    %310 = vmatprep.subr.mxu0 0.0
    %311 = vmatpush1.msra.mxu0 0.0
    %312 = vmatprep.subr.mxu0 0.0
    %313 = vmatpush1.msra.mxu0 0.0
    %314 = vmatprep.subr.mxu0 0.0
    %315 = vmatpush1.msra.mxu0 0.0
    %316 = vmatprep.subr.mxu0 0.0
    %317 = vmatpush1.msra.mxu0 0.0
    %318 = vmatprep.subr.mxu0 0.0
    %319 = vmatpush1.msra.mxu0 0.0
    %320 = vmatprep.subr.mxu0 0.0
    %321 = vmatpush1.msra.mxu0 0.0
    %322 = vmatprep.subr.mxu0 0.0
    %323 = vmatpush1.msra.mxu0 0.0
    %324 = vmatprep.subr.mxu0 0.0
    %325 = vmatpush1.msra.mxu0 0.0
    %326 = vmatprep.subr.mxu0 0.0
    %327 = vmatpush1.msra.mxu0 0.0
    %328 = vmatprep.subr.mxu0 0.0
    %329 = vmatpush1.msra.mxu0 0.0
    %330 = vmatprep.subr.mxu0 0.0
    %331 = vmatpush1.msra.mxu0 0.0
    %332 = vmatprep.subr.mxu0 0.0
    %333 = vmatpush1.msra.mxu0 0.0
    %334 = vmatprep.subr.mxu0 0.0
    %335 = vmatpush1.msra.mxu0 0.0
    %336 = vmatprep.subr.mxu0 0.0
    %337 = vmatpush1.msra.mxu0 0.0
    %338 = vmatprep.subr.mxu0 0.0
    %339 = vmatpush1.msra.mxu0 0.0
    %340 = vmatprep.subr.mxu0 0.0
    %341 = vmatpush1.msra.mxu0 0.0
    %342 = vmatprep.subr.mxu0 0.0
    %343 = vmatpush1.msra.mxu0 0.0
    %344 = vmatprep.subr.mxu0 0.0
    %345 = vmatpush1.msra.mxu0 0.0
    %346 = vmatprep.subr.mxu0 0.0
    %347 = vmatpush1.msra.mxu0 0.0
    %348 = vmatprep.subr.mxu0 0.0
    %349 = vmatpush1.msra.mxu0 0.0
    %350 = vmatprep.subr.mxu0 0.0
    %351 = vmatpush1.msra.mxu0 0.0
    %352 = vmatprep.subr.mxu0 0.0
    %353 = vmatpush1.msra.mxu0 0.0
    %354 = vmatprep.subr.mxu0 0.0
    %355 = vmatpush1.msra.mxu0 0.0
    %356 = vmatprep.subr.mxu0 0.0
    %357 = vmatpush1.msra.mxu0 0.0
    %358 = vmatprep.subr.mxu0 0.0
    %359 = vmatpush1.msra.mxu0 0.0
    %360 = vmatprep.subr.mxu0 0.0
    %361 = vmatpush1.msra.mxu0 0.0
    %362 = vmatprep.subr.mxu0 0.0
    %363 = vmatpush1.msra.mxu0 0.0
    %364 = vmatprep.subr.mxu0 0.0
    %365 = vmatpush1.msra.mxu0 0.0
    %366 = vmatprep.mubr.f32.mxu0 0.0
    %367 = vmatmul.mubr.f32.gmra.mrb[0].mxu0 %v300
    %v368 = vpop.f32.mrb[0].mxu0
    %v369 = vadd.f32 0.0, %v368
    %v370 = vpop.f32.mrb[0].mxu0
    %371 = vdwg.mxu0
    %v373 = vrot.slane %v369, 1
    %v376 = vadd.f32 %v282, %v369
    %v377 = vadd.f32 %v287, %v373
    %v378 = vtanh.pop %v376
    %v379 = vtanh.pop %v377
    %v381 = vlaneseq
    %v382 = vshrl.u32 %v381, 7
    %v383 = vsub.s32 0, %v382
    %v384 = vrot.slane %v298, %v383
    %v388 = vrot.slane %v379, 7
    %vm389 = vcmask 1041409
    %v390 = vsel %vm389, %v388, %v378
    %v391 = vsel %vm208, %v390, 0
    %393 = vmatprep.subr.mxu0 0.0
    %394 = vmatpush1.msra.mxu0 %v294
    %395 = vmatprep.subr.mxu0 0.0
    %396 = vmatpush1.msra.mxu0 %v295
    %397 = vmatprep.subr.mxu0 0.0
    %398 = vmatpush1.msra.mxu0 %v296
    %399 = vmatprep.subr.mxu0 0.0
    %400 = vmatpush1.msra.mxu0 %v297
    %401 = vmatprep.subr.mxu0 0.0
    %402 = vmatpush1.msra.mxu0 0.0
    %403 = vmatprep.subr.mxu0 0.0
    %404 = vmatpush1.msra.mxu0 0.0
    %405 = vmatprep.subr.mxu0 0.0
    %406 = vmatpush1.msra.mxu0 0.0
    %407 = vmatprep.subr.mxu0 0.0
    %408 = vmatpush1.msra.mxu0 0.0
    %409 = vmatprep.subr.mxu0 0.0
    %410 = vmatpush1.msra.mxu0 0.0
    %411 = vmatprep.subr.mxu0 0.0
    %412 = vmatpush1.msra.mxu0 0.0
    %413 = vmatprep.subr.mxu0 0.0
    %414 = vmatpush1.msra.mxu0 0.0
    %415 = vmatprep.subr.mxu0 0.0
    %416 = vmatpush1.msra.mxu0 0.0
    %417 = vmatprep.subr.mxu0 0.0
    %418 = vmatpush1.msra.mxu0 0.0
    %419 = vmatprep.subr.mxu0 0.0
    %420 = vmatpush1.msra.mxu0 0.0
    %421 = vmatprep.subr.mxu0 0.0
    %422 = vmatpush1.msra.mxu0 0.0
    %423 = vmatprep.subr.mxu0 0.0
    %424 = vmatpush1.msra.mxu0 0.0
    %425 = vmatprep.subr.mxu0 0.0
    %426 = vmatpush1.msra.mxu0 0.0
    %427 = vmatprep.subr.mxu0 0.0
    %428 = vmatpush1.msra.mxu0 0.0
    %429 = vmatprep.subr.mxu0 0.0
    %430 = vmatpush1.msra.mxu0 0.0
    %431 = vmatprep.subr.mxu0 0.0
    %432 = vmatpush1.msra.mxu0 0.0
    %433 = vmatprep.subr.mxu0 0.0
    %434 = vmatpush1.msra.mxu0 0.0
    %435 = vmatprep.subr.mxu0 0.0
    %436 = vmatpush1.msra.mxu0 0.0
    %437 = vmatprep.subr.mxu0 0.0
    %438 = vmatpush1.msra.mxu0 0.0
    %439 = vmatprep.subr.mxu0 0.0
    %440 = vmatpush1.msra.mxu0 0.0
    %441 = vmatprep.subr.mxu0 0.0
    %442 = vmatpush1.msra.mxu0 0.0
    %443 = vmatprep.subr.mxu0 0.0
    %444 = vmatpush1.msra.mxu0 0.0
    %445 = vmatprep.subr.mxu0 0.0
    %446 = vmatpush1.msra.mxu0 0.0
    %447 = vmatprep.subr.mxu0 0.0
    %448 = vmatpush1.msra.mxu0 0.0
    %449 = vmatprep.subr.mxu0 0.0
    %450 = vmatpush1.msra.mxu0 0.0
    %451 = vmatprep.subr.mxu0 0.0
    %452 = vmatpush1.msra.mxu0 0.0
    %453 = vmatprep.subr.mxu0 0.0
    %454 = vmatpush1.msra.mxu0 0.0
    %455 = vmatprep.subr.mxu0 0.0
    %456 = vmatpush1.msra.mxu0 0.0
    %457 = vmatprep.mubr.f32.mxu0 0.0
    %458 = vmatmul.mubr.f32.gmra.mrb[0].mxu0 %v391
    %v459 = vpop.f32.mrb[0].mxu0
    %v460 = vadd.f32 %v384, %v459
    %v461 = vpop.f32.mrb[0].mxu0
    %462 = vdwg.mxu0
    %v465 = vunpack.c.l.s4 1966171168
    %v466 = vunpack.c.0.s8 %v465
    %v467 = vlaneseq
    %v468 = vshrl.u32 %v467, 7
    %v469 = vsub.s32 %v466, %v468
    %v470 = vrot.slane %v460, %v469
    %v471 = vcombine.high %v470, %v470
    %v473 = vunpack.c.l.s4 1966171168
    %v474 = vunpack.c.0.s8 %v473
    %v475 = vlaneseq
    %v476 = vshrl.u32 %v475, 7
    %v477 = vsub.s32 %v474, %v476
    %v478 = vrot.slane %v470, %v477
    %v480 = vunpack.c.l.s4 1966171168
    %v481 = vunpack.c.0.s8 %v480
    %v482 = vlaneseq
    %v483 = vshrl.u32 %v482, 7
    %v484 = vsub.s32 %v481, %v483
    %v485 = vrot.slane %v471, %v484
    %vm488 = vcmask 73728
    %489 = vst.msk [vmem:[#allocation11] sm:$0x1] %vm488, %v478
    %490 = vst.msk [vmem:[#allocation11 + $0x8] sm:$0x1] %vm488, %v485
    %491 = vmatprep.subr.mxu0 0.0
    %492 = vmatpush1.msra.mxu0 %v290
    %493 = vmatprep.subr.mxu0 0.0
    %494 = vmatpush1.msra.mxu0 %v291
    %495 = vmatprep.subr.mxu0 0.0
    %496 = vmatpush1.msra.mxu0 %v292
    %497 = vmatprep.subr.mxu0 0.0
    %498 = vmatpush1.msra.mxu0 %v293
    %499 = vmatprep.subr.mxu0 0.0
    %500 = vmatpush1.msra.mxu0 0.0
    %501 = vmatprep.subr.mxu0 0.0
    %502 = vmatpush1.msra.mxu0 0.0
    %503 = vmatprep.subr.mxu0 0.0
    %504 = vmatpush1.msra.mxu0 0.0
    %505 = vmatprep.subr.mxu0 0.0
    %506 = vmatpush1.msra.mxu0 0.0
    %507 = vmatprep.subr.mxu0 0.0
    %508 = vmatpush1.msra.mxu0 0.0
    %509 = vmatprep.subr.mxu0 0.0
    %510 = vmatpush1.msra.mxu0 0.0
    %511 = vmatprep.subr.mxu0 0.0
    %512 = vmatpush1.msra.mxu0 0.0
    %513 = vmatprep.subr.mxu0 0.0
    %514 = vmatpush1.msra.mxu0 0.0
    %515 = vmatprep.subr.mxu0 0.0
    %516 = vmatpush1.msra.mxu0 0.0
    %517 = vmatprep.subr.mxu0 0.0
    %518 = vmatpush1.msra.mxu0 0.0
    %519 = vmatprep.subr.mxu0 0.0
    %520 = vmatpush1.msra.mxu0 0.0
    %521 = vmatprep.subr.mxu0 0.0
    %522 = vmatpush1.msra.mxu0 0.0
    %523 = vmatprep.subr.mxu0 0.0
    %524 = vmatpush1.msra.mxu0 0.0
    %525 = vmatprep.subr.mxu0 0.0
    %526 = vmatpush1.msra.mxu0 0.0
    %527 = vmatprep.subr.mxu0 0.0
    %528 = vmatpush1.msra.mxu0 0.0
    %529 = vmatprep.subr.mxu0 0.0
    %530 = vmatpush1.msra.mxu0 0.0
    %531 = vmatprep.subr.mxu0 0.0
    %532 = vmatpush1.msra.mxu0 0.0
    %533 = vmatprep.subr.mxu0 0.0
    %534 = vmatpush1.msra.mxu0 0.0
    %535 = vmatprep.subr.mxu0 0.0
    %536 = vmatpush1.msra.mxu0 0.0
    %537 = vmatprep.subr.mxu0 0.0
    %538 = vmatpush1.msra.mxu0 0.0
    %539 = vmatprep.subr.mxu0 0.0
    %540 = vmatpush1.msra.mxu0 0.0
    %541 = vmatprep.subr.mxu0 0.0
    %542 = vmatpush1.msra.mxu0 0.0
    %543 = vmatprep.subr.mxu0 0.0
    %544 = vmatpush1.msra.mxu0 0.0
    %545 = vmatprep.subr.mxu0 0.0
    %546 = vmatpush1.msra.mxu0 0.0
    %547 = vmatprep.subr.mxu0 0.0
    %548 = vmatpush1.msra.mxu0 0.0
    %549 = vmatprep.subr.mxu0 0.0
    %550 = vmatpush1.msra.mxu0 0.0
    %551 = vmatprep.subr.mxu0 0.0
    %552 = vmatpush1.msra.mxu0 0.0
    %553 = vmatprep.subr.mxu0 0.0
    %554 = vmatpush1.msra.mxu0 0.0
    %555 = vmatprep.mubr.f32.mxu0 0.0
    %556 = vmatmul.mubr.f32.gmra.mrb[0].mxu0 %v391
    %v557 = vpop.f32.mrb[0].mxu0
    %v558 = vadd.f32 0.0, %v557
    %v559 = vpop.f32.mrb[0].mxu0
    %560 = vdwg.mxu0
    %v562 = vrot.slane %v558, 7
    %v565 = vadd.f32 %v282, %v562
    %v566 = vadd.f32 %v287, %v558
    %v567 = vtanh.pop %v565
    %v568 = vtanh.pop %v566
    %v571 = vrot.slane %v567, 1
    %v572 = vsel %vm389, %v568, %v571
    %v573 = vsel %vm208, %v572, 0
    %575 = vmatprep.subr.mxu0 0.0
    %576 = vmatpush1.msra.mxu0 %v294
    %577 = vmatprep.subr.mxu0 0.0
    %578 = vmatpush1.msra.mxu0 %v295
    %579 = vmatprep.subr.mxu0 0.0
    %580 = vmatpush1.msra.mxu0 %v296
    %581 = vmatprep.subr.mxu0 0.0
    %582 = vmatpush1.msra.mxu0 %v297
    %583 = vmatprep.subr.mxu0 0.0
    %584 = vmatpush1.msra.mxu0 0.0
    %585 = vmatprep.subr.mxu0 0.0
    %586 = vmatpush1.msra.mxu0 0.0
    %587 = vmatprep.subr.mxu0 0.0
    %588 = vmatpush1.msra.mxu0 0.0
    %589 = vmatprep.subr.mxu0 0.0
    %590 = vmatpush1.msra.mxu0 0.0
    %591 = vmatprep.subr.mxu0 0.0
    %592 = vmatpush1.msra.mxu0 0.0
    %593 = vmatprep.subr.mxu0 0.0
    %594 = vmatpush1.msra.mxu0 0.0
    %595 = vmatprep.subr.mxu0 0.0
    %596 = vmatpush1.msra.mxu0 0.0
    %597 = vmatprep.subr.mxu0 0.0
    %598 = vmatpush1.msra.mxu0 0.0
    %599 = vmatprep.subr.mxu0 0.0
    %600 = vmatpush1.msra.mxu0 0.0
    %601 = vmatprep.subr.mxu0 0.0
    %602 = vmatpush1.msra.mxu0 0.0
    %603 = vmatprep.subr.mxu0 0.0
    %604 = vmatpush1.msra.mxu0 0.0
    %605 = vmatprep.subr.mxu0 0.0
    %606 = vmatpush1.msra.mxu0 0.0
    %607 = vmatprep.subr.mxu0 0.0
    %608 = vmatpush1.msra.mxu0 0.0
    %609 = vmatprep.subr.mxu0 0.0
    %610 = vmatpush1.msra.mxu0 0.0
    %611 = vmatprep.subr.mxu0 0.0
    %612 = vmatpush1.msra.mxu0 0.0
    %613 = vmatprep.subr.mxu0 0.0
    %614 = vmatpush1.msra.mxu0 0.0
    %615 = vmatprep.subr.mxu0 0.0
    %616 = vmatpush1.msra.mxu0 0.0
    %617 = vmatprep.subr.mxu0 0.0
    %618 = vmatpush1.msra.mxu0 0.0
    %619 = vmatprep.subr.mxu0 0.0
    %620 = vmatpush1.msra.mxu0 0.0
    %621 = vmatprep.subr.mxu0 0.0
    %622 = vmatpush1.msra.mxu0 0.0
    %623 = vmatprep.subr.mxu0 0.0
    %624 = vmatpush1.msra.mxu0 0.0
    %625 = vmatprep.subr.mxu0 0.0
    %626 = vmatpush1.msra.mxu0 0.0
    %627 = vmatprep.subr.mxu0 0.0
    %628 = vmatpush1.msra.mxu0 0.0
    %629 = vmatprep.subr.mxu0 0.0
    %630 = vmatpush1.msra.mxu0 0.0
    %631 = vmatprep.subr.mxu0 0.0
    %632 = vmatpush1.msra.mxu0 0.0
    %633 = vmatprep.subr.mxu0 0.0
    %634 = vmatpush1.msra.mxu0 0.0
    %635 = vmatprep.subr.mxu0 0.0
    %636 = vmatpush1.msra.mxu0 0.0
    %637 = vmatprep.subr.mxu0 0.0
    %638 = vmatpush1.msra.mxu0 0.0
    %639 = vmatprep.mubr.f32.mxu0 0.0
    %640 = vmatmul.mubr.f32.gmra.mrb[0].mxu0 %v573
    %v641 = vpop.f32.mrb[0].mxu0
    %v642 = vadd.f32 %v384, %v641
    %v643 = vpop.f32.mrb[0].mxu0
    %644 = vdwg.mxu0
    %v647 = vunpack.c.l.s4 1966171168
    %v648 = vunpack.c.0.s8 %v647
    %v649 = vlaneseq
    %v650 = vshrl.u32 %v649, 7
    %v651 = vsub.s32 %v648, %v650
    %v652 = vrot.slane %v642, %v651
    %v653 = vcombine.high %v652, %v652
    %v655 = vunpack.c.l.s4 1966171168
    %v656 = vunpack.c.0.s8 %v655
    %v657 = vlaneseq
    %v658 = vshrl.u32 %v657, 7
    %v659 = vsub.s32 %v656, %v658
    %v660 = vrot.slane %v652, %v659
    %v662 = vunpack.c.l.s4 1966171168
    %v663 = vunpack.c.0.s8 %v662
    %v664 = vlaneseq
    %v665 = vshrl.u32 %v664, 7
    %v666 = vsub.s32 %v663, %v665
    %v667 = vrot.slane %v653, %v666
    %670 = vst.msk [vmem:[#allocation11 + $0x1] sm:$0x1] %vm488, %v660
    %671 = vst.msk [vmem:[#allocation11 + $0x9] sm:$0x1] %vm488, %v667
    %672 = vmatprep.subr.mxu0 0.0
    %673 = vmatpush1.msra.mxu0 %v290
    %674 = vmatprep.subr.mxu0 0.0
    %675 = vmatpush1.msra.mxu0 %v291
    %676 = vmatprep.subr.mxu0 0.0
    %677 = vmatpush1.msra.mxu0 %v292
    %678 = vmatprep.subr.mxu0 0.0
    %679 = vmatpush1.msra.mxu0 %v293
    %680 = vmatprep.subr.mxu0 0.0
    %681 = vmatpush1.msra.mxu0 0.0
    %682 = vmatprep.subr.mxu0 0.0
    %683 = vmatpush1.msra.mxu0 0.0
    %684 = vmatprep.subr.mxu0 0.0
    %685 = vmatpush1.msra.mxu0 0.0
    %686 = vmatprep.subr.mxu0 0.0
    %687 = vmatpush1.msra.mxu0 0.0
    %688 = vmatprep.subr.mxu0 0.0
    %689 = vmatpush1.msra.mxu0 0.0
    %690 = vmatprep.subr.mxu0 0.0
    %691 = vmatpush1.msra.mxu0 0.0
    %692 = vmatprep.subr.mxu0 0.0
    %693 = vmatpush1.msra.mxu0 0.0
    %694 = vmatprep.subr.mxu0 0.0
    %695 = vmatpush1.msra.mxu0 0.0
    %696 = vmatprep.subr.mxu0 0.0
    %697 = vmatpush1.msra.mxu0 0.0
    %698 = vmatprep.subr.mxu0 0.0
    %699 = vmatpush1.msra.mxu0 0.0
    %700 = vmatprep.subr.mxu0 0.0
    %701 = vmatpush1.msra.mxu0 0.0
    %702 = vmatprep.subr.mxu0 0.0
    %703 = vmatpush1.msra.mxu0 0.0
    %704 = vmatprep.subr.mxu0 0.0
    %705 = vmatpush1.msra.mxu0 0.0
    %706 = vmatprep.subr.mxu0 0.0
    %707 = vmatpush1.msra.mxu0 0.0
    %708 = vmatprep.subr.mxu0 0.0
    %709 = vmatpush1.msra.mxu0 0.0
    %710 = vmatprep.subr.mxu0 0.0
    %711 = vmatpush1.msra.mxu0 0.0
    %712 = vmatprep.subr.mxu0 0.0
    %713 = vmatpush1.msra.mxu0 0.0
    %714 = vmatprep.subr.mxu0 0.0
    %715 = vmatpush1.msra.mxu0 0.0
    %716 = vmatprep.subr.mxu0 0.0
    %717 = vmatpush1.msra.mxu0 0.0
    %718 = vmatprep.subr.mxu0 0.0
    %719 = vmatpush1.msra.mxu0 0.0
    %720 = vmatprep.subr.mxu0 0.0
    %721 = vmatpush1.msra.mxu0 0.0
    %722 = vmatprep.subr.mxu0 0.0
    %723 = vmatpush1.msra.mxu0 0.0
    %724 = vmatprep.subr.mxu0 0.0
    %725 = vmatpush1.msra.mxu0 0.0
    %726 = vmatprep.subr.mxu0 0.0
    %727 = vmatpush1.msra.mxu0 0.0
    %728 = vmatprep.subr.mxu0 0.0
    %729 = vmatpush1.msra.mxu0 0.0
    %730 = vmatprep.subr.mxu0 0.0
    %731 = vmatpush1.msra.mxu0 0.0
    %732 = vmatprep.subr.mxu0 0.0
    %733 = vmatpush1.msra.mxu0 0.0
    %734 = vmatprep.subr.mxu0 0.0
    %735 = vmatpush1.msra.mxu0 0.0
    %736 = vmatprep.mubr.f32.mxu0 0.0
    %737 = vmatmul.mubr.f32.gmra.mrb[0].mxu0 %v573
    %v738 = vpop.f32.mrb[0].mxu0
    %v739 = vadd.f32 0.0, %v738
    %v740 = vpop.f32.mrb[0].mxu0
    %741 = vdwg.mxu0
    %v743 = vrot.slane %v739, 6
    %v744 = vrot.slane %v739, 7
    %v747 = vadd.f32 %v282, %v743
    %v748 = vadd.f32 %v287, %v744
    %v749 = vtanh.pop %v747
    %v750 = vtanh.pop %v748
    %v753 = vrot.slane %v749, 2
    %v754 = vrot.slane %v750, 1
    %v755 = vsel %vm389, %v754, %v753
    %v756 = vsel %vm208, %v755, 0
    %758 = vmatprep.subr.mxu0 0.0
    %759 = vmatpush1.msra.mxu0 %v294
    %760 = vmatprep.subr.mxu0 0.0
    %761 = vmatpush1.msra.mxu0 %v295
    %762 = vmatprep.subr.mxu0 0.0
    %763 = vmatpush1.msra.mxu0 %v296
    %764 = vmatprep.subr.mxu0 0.0
    %765 = vmatpush1.msra.mxu0 %v297
    %766 = vmatprep.subr.mxu0 0.0
    %767 = vmatpush1.msra.mxu0 0.0
    %768 = vmatprep.subr.mxu0 0.0
    %769 = vmatpush1.msra.mxu0 0.0
    %770 = vmatprep.subr.mxu0 0.0
    %771 = vmatpush1.msra.mxu0 0.0
    %772 = vmatprep.subr.mxu0 0.0
    %773 = vmatpush1.msra.mxu0 0.0
    %774 = vmatprep.subr.mxu0 0.0
    %775 = vmatpush1.msra.mxu0 0.0
    %776 = vmatprep.subr.mxu0 0.0
    %777 = vmatpush1.msra.mxu0 0.0
    %778 = vmatprep.subr.mxu0 0.0
    %779 = vmatpush1.msra.mxu0 0.0
    %780 = vmatprep.subr.mxu0 0.0
    %781 = vmatpush1.msra.mxu0 0.0
    %782 = vmatprep.subr.mxu0 0.0
    %783 = vmatpush1.msra.mxu0 0.0
    %784 = vmatprep.subr.mxu0 0.0
    %785 = vmatpush1.msra.mxu0 0.0
    %786 = vmatprep.subr.mxu0 0.0
    %787 = vmatpush1.msra.mxu0 0.0
    %788 = vmatprep.subr.mxu0 0.0
    %789 = vmatpush1.msra.mxu0 0.0
    %790 = vmatprep.subr.mxu0 0.0
    %791 = vmatpush1.msra.mxu0 0.0
    %792 = vmatprep.subr.mxu0 0.0
    %793 = vmatpush1.msra.mxu0 0.0
    %794 = vmatprep.subr.mxu0 0.0
    %795 = vmatpush1.msra.mxu0 0.0
    %796 = vmatprep.subr.mxu0 0.0
    %797 = vmatpush1.msra.mxu0 0.0
    %798 = vmatprep.subr.mxu0 0.0
    %799 = vmatpush1.msra.mxu0 0.0
    %800 = vmatprep.subr.mxu0 0.0
    %801 = vmatpush1.msra.mxu0 0.0
    %802 = vmatprep.subr.mxu0 0.0
    %803 = vmatpush1.msra.mxu0 0.0
    %804 = vmatprep.subr.mxu0 0.0
    %805 = vmatpush1.msra.mxu0 0.0
    %806 = vmatprep.subr.mxu0 0.0
    %807 = vmatpush1.msra.mxu0 0.0
    %808 = vmatprep.subr.mxu0 0.0
    %809 = vmatpush1.msra.mxu0 0.0
    %810 = vmatprep.subr.mxu0 0.0
    %811 = vmatpush1.msra.mxu0 0.0
    %812 = vmatprep.subr.mxu0 0.0
    %813 = vmatpush1.msra.mxu0 0.0
    %814 = vmatprep.subr.mxu0 0.0
    %815 = vmatpush1.msra.mxu0 0.0
    %816 = vmatprep.subr.mxu0 0.0
    %817 = vmatpush1.msra.mxu0 0.0
    %818 = vmatprep.subr.mxu0 0.0
    %819 = vmatpush1.msra.mxu0 0.0
    %820 = vmatprep.subr.mxu0 0.0
    %821 = vmatpush1.msra.mxu0 0.0
    %822 = vmatprep.mubr.f32.mxu0 0.0
    %823 = vmatmul.mubr.f32.gmra.mrb[0].mxu0 %v756
    %v824 = vpop.f32.mrb[0].mxu0
    %v825 = vadd.f32 %v384, %v824
    %v826 = vpop.f32.mrb[0].mxu0
    %827 = vdwg.mxu0
    %v830 = vunpack.c.l.s4 1966171168
    %v831 = vunpack.c.0.s8 %v830
    %v832 = vlaneseq
    %v833 = vshrl.u32 %v832, 7
    %v834 = vsub.s32 %v831, %v833
    %v835 = vrot.slane %v825, %v834
    %v836 = vcombine.high %v835, %v835
    %v838 = vunpack.c.l.s4 1966171168
    %v839 = vunpack.c.0.s8 %v838
    %v840 = vlaneseq
    %v841 = vshrl.u32 %v840, 7
    %v842 = vsub.s32 %v839, %v841
    %v843 = vrot.slane %v835, %v842
    %v845 = vunpack.c.l.s4 1966171168
    %v846 = vunpack.c.0.s8 %v845
    %v847 = vlaneseq
    %v848 = vshrl.u32 %v847, 7
    %v849 = vsub.s32 %v846, %v848
    %v850 = vrot.slane %v836, %v849
    %853 = vst.msk [vmem:[#allocation11 + $0x2] sm:$0x1] %vm488, %v843
    %854 = vst.msk [vmem:[#allocation11 + $0xa] sm:$0x1] %vm488, %v850
    %855 = vmatprep.subr.mxu0 0.0
    %856 = vmatpush1.msra.mxu0 %v290
    %857 = vmatprep.subr.mxu0 0.0
    %858 = vmatpush1.msra.mxu0 %v291
    %859 = vmatprep.subr.mxu0 0.0
    %860 = vmatpush1.msra.mxu0 %v292
    %861 = vmatprep.subr.mxu0 0.0
    %862 = vmatpush1.msra.mxu0 %v293
    %863 = vmatprep.subr.mxu0 0.0
    %864 = vmatpush1.msra.mxu0 0.0
    %865 = vmatprep.subr.mxu0 0.0
    %866 = vmatpush1.msra.mxu0 0.0
    %867 = vmatprep.subr.mxu0 0.0
    %868 = vmatpush1.msra.mxu0 0.0
    %869 = vmatprep.subr.mxu0 0.0
    %870 = vmatpush1.msra.mxu0 0.0
    %871 = vmatprep.subr.mxu0 0.0
    %872 = vmatpush1.msra.mxu0 0.0
    %873 = vmatprep.subr.mxu0 0.0
    %874 = vmatpush1.msra.mxu0 0.0
    %875 = vmatprep.subr.mxu0 0.0
    %876 = vmatpush1.msra.mxu0 0.0
    %877 = vmatprep.subr.mxu0 0.0
    %878 = vmatpush1.msra.mxu0 0.0
    %879 = vmatprep.subr.mxu0 0.0
    %880 = vmatpush1.msra.mxu0 0.0
    %881 = vmatprep.subr.mxu0 0.0
    %882 = vmatpush1.msra.mxu0 0.0
    %883 = vmatprep.subr.mxu0 0.0
    %884 = vmatpush1.msra.mxu0 0.0
    %885 = vmatprep.subr.mxu0 0.0
    %886 = vmatpush1.msra.mxu0 0.0
    %887 = vmatprep.subr.mxu0 0.0
    %888 = vmatpush1.msra.mxu0 0.0
    %889 = vmatprep.subr.mxu0 0.0
    %890 = vmatpush1.msra.mxu0 0.0
    %891 = vmatprep.subr.mxu0 0.0
    %892 = vmatpush1.msra.mxu0 0.0
    %893 = vmatprep.subr.mxu0 0.0
    %894 = vmatpush1.msra.mxu0 0.0
    %895 = vmatprep.subr.mxu0 0.0
    %896 = vmatpush1.msra.mxu0 0.0
    %897 = vmatprep.subr.mxu0 0.0
    %898 = vmatpush1.msra.mxu0 0.0
    %899 = vmatprep.subr.mxu0 0.0
    %900 = vmatpush1.msra.mxu0 0.0
    %901 = vmatprep.subr.mxu0 0.0
    %902 = vmatpush1.msra.mxu0 0.0
    %903 = vmatprep.subr.mxu0 0.0
    %904 = vmatpush1.msra.mxu0 0.0
    %905 = vmatprep.subr.mxu0 0.0
    %906 = vmatpush1.msra.mxu0 0.0
    %907 = vmatprep.subr.mxu0 0.0
    %908 = vmatpush1.msra.mxu0 0.0
    %909 = vmatprep.subr.mxu0 0.0
    %910 = vmatpush1.msra.mxu0 0.0
    %911 = vmatprep.subr.mxu0 0.0
    %912 = vmatpush1.msra.mxu0 0.0
    %913 = vmatprep.subr.mxu0 0.0
    %914 = vmatpush1.msra.mxu0 0.0
    %915 = vmatprep.subr.mxu0 0.0
    %916 = vmatpush1.msra.mxu0 0.0
    %917 = vmatprep.subr.mxu0 0.0
    %918 = vmatpush1.msra.mxu0 0.0
    %919 = vmatprep.mubr.f32.mxu0 0.0
    %920 = vmatmul.mubr.f32.gmra.mrb[0].mxu0 %v756
    %v921 = vpop.f32.mrb[0].mxu0
    %v922 = vadd.f32 0.0, %v921
    %v923 = vpop.f32.mrb[0].mxu0
    %924 = vdwg.mxu0
    %v926 = vrot.slane %v922, 5
    %v927 = vrot.slane %v922, 6
    %v930 = vadd.f32 %v282, %v926
    %v931 = vadd.f32 %v287, %v927
    %v932 = vtanh.pop %v930
    %v933 = vtanh.pop %v931
    %v936 = vrot.slane %v932, 3
    %v937 = vrot.slane %v933, 2
    %v938 = vsel %vm389, %v937, %v936
    %v939 = vsel %vm208, %v938, 0
    %941 = vmatprep.subr.mxu0 0.0
    %942 = vmatpush1.msra.mxu0 %v294
    %943 = vmatprep.subr.mxu0 0.0
    %944 = vmatpush1.msra.mxu0 %v295
    %945 = vmatprep.subr.mxu0 0.0
    %946 = vmatpush1.msra.mxu0 %v296
    %947 = vmatprep.subr.mxu0 0.0
    %948 = vmatpush1.msra.mxu0 %v297
    %949 = vmatprep.subr.mxu0 0.0
    %950 = vmatpush1.msra.mxu0 0.0
    %951 = vmatprep.subr.mxu0 0.0
    %952 = vmatpush1.msra.mxu0 0.0
    %953 = vmatprep.subr.mxu0 0.0
    %954 = vmatpush1.msra.mxu0 0.0
    %955 = vmatprep.subr.mxu0 0.0
    %956 = vmatpush1.msra.mxu0 0.0
    %957 = vmatprep.subr.mxu0 0.0
    %958 = vmatpush1.msra.mxu0 0.0
    %959 = vmatprep.subr.mxu0 0.0
    %960 = vmatpush1.msra.mxu0 0.0
    %961 = vmatprep.subr.mxu0 0.0
    %962 = vmatpush1.msra.mxu0 0.0
    %963 = vmatprep.subr.mxu0 0.0
    %964 = vmatpush1.msra.mxu0 0.0
    %965 = vmatprep.subr.mxu0 0.0
    %966 = vmatpush1.msra.mxu0 0.0
    %967 = vmatprep.subr.mxu0 0.0
    %968 = vmatpush1.msra.mxu0 0.0
    %969 = vmatprep.subr.mxu0 0.0
    %970 = vmatpush1.msra.mxu0 0.0
    %971 = vmatprep.subr.mxu0 0.0
    %972 = vmatpush1.msra.mxu0 0.0
    %973 = vmatprep.subr.mxu0 0.0
    %974 = vmatpush1.msra.mxu0 0.0
    %975 = vmatprep.subr.mxu0 0.0
    %976 = vmatpush1.msra.mxu0 0.0
    %977 = vmatprep.subr.mxu0 0.0
    %978 = vmatpush1.msra.mxu0 0.0
    %979 = vmatprep.subr.mxu0 0.0
    %980 = vmatpush1.msra.mxu0 0.0
    %981 = vmatprep.subr.mxu0 0.0
    %982 = vmatpush1.msra.mxu0 0.0
    %983 = vmatprep.subr.mxu0 0.0
    %984 = vmatpush1.msra.mxu0 0.0
    %985 = vmatprep.subr.mxu0 0.0
    %986 = vmatpush1.msra.mxu0 0.0
    %987 = vmatprep.subr.mxu0 0.0
    %988 = vmatpush1.msra.mxu0 0.0
    %989 = vmatprep.subr.mxu0 0.0
    %990 = vmatpush1.msra.mxu0 0.0
    %991 = vmatprep.subr.mxu0 0.0
    %992 = vmatpush1.msra.mxu0 0.0
    %993 = vmatprep.subr.mxu0 0.0
    %994 = vmatpush1.msra.mxu0 0.0
    %995 = vmatprep.subr.mxu0 0.0
    %996 = vmatpush1.msra.mxu0 0.0
    %997 = vmatprep.subr.mxu0 0.0
    %998 = vmatpush1.msra.mxu0 0.0
    %999 = vmatprep.subr.mxu0 0.0
    %1000 = vmatpush1.msra.mxu0 0.0
    %1001 = vmatprep.subr.mxu0 0.0
    %1002 = vmatpush1.msra.mxu0 0.0
    %1003 = vmatprep.subr.mxu0 0.0
    %1004 = vmatpush1.msra.mxu0 0.0
    %1005 = vmatprep.mubr.f32.mxu0 0.0
    %1006 = vmatmul.mubr.f32.gmra.mrb[0].mxu0 %v939
    %v1007 = vpop.f32.mrb[0].mxu0
    %v1008 = vadd.f32 %v384, %v1007
    %v1009 = vpop.f32.mrb[0].mxu0
    %1010 = vdwg.mxu0
    %v1013 = vunpack.c.l.s4 1966171168
    %v1014 = vunpack.c.0.s8 %v1013
    %v1015 = vlaneseq
    %v1016 = vshrl.u32 %v1015, 7
    %v1017 = vsub.s32 %v1014, %v1016
    %v1018 = vrot.slane %v1008, %v1017
    %v1019 = vcombine.high %v1018, %v1018
    %v1021 = vunpack.c.l.s4 1966171168
    %v1022 = vunpack.c.0.s8 %v1021
    %v1023 = vlaneseq
    %v1024 = vshrl.u32 %v1023, 7
    %v1025 = vsub.s32 %v1022, %v1024
    %v1026 = vrot.slane %v1018, %v1025
    %v1028 = vunpack.c.l.s4 1966171168
    %v1029 = vunpack.c.0.s8 %v1028
    %v1030 = vlaneseq
    %v1031 = vshrl.u32 %v1030, 7
    %v1032 = vsub.s32 %v1029, %v1031
    %v1033 = vrot.slane %v1019, %v1032
    %1036 = vst.msk [vmem:[#allocation11 + $0x3] sm:$0x1] %vm488, %v1026
    %1037 = vst.msk [vmem:[#allocation11 + $0xb] sm:$0x1] %vm488, %v1033
    %1038 = vmatprep.subr.mxu0 0.0
    %1039 = vmatpush1.msra.mxu0 %v290
    %1040 = vmatprep.subr.mxu0 0.0
    %1041 = vmatpush1.msra.mxu0 %v291
    %1042 = vmatprep.subr.mxu0 0.0
    %1043 = vmatpush1.msra.mxu0 %v292
    %1044 = vmatprep.subr.mxu0 0.0
    %1045 = vmatpush1.msra.mxu0 %v293
    %1046 = vmatprep.subr.mxu0 0.0
    %1047 = vmatpush1.msra.mxu0 0.0
    %1048 = vmatprep.subr.mxu0 0.0
    %1049 = vmatpush1.msra.mxu0 0.0
    %1050 = vmatprep.subr.mxu0 0.0
    %1051 = vmatpush1.msra.mxu0 0.0
    %1052 = vmatprep.subr.mxu0 0.0
    %1053 = vmatpush1.msra.mxu0 0.0
    %1054 = vmatprep.subr.mxu0 0.0
    %1055 = vmatpush1.msra.mxu0 0.0
    %1056 = vmatprep.subr.mxu0 0.0
    %1057 = vmatpush1.msra.mxu0 0.0
    %1058 = vmatprep.subr.mxu0 0.0
    %1059 = vmatpush1.msra.mxu0 0.0
    %1060 = vmatprep.subr.mxu0 0.0
    %1061 = vmatpush1.msra.mxu0 0.0
    %1062 = vmatprep.subr.mxu0 0.0
    %1063 = vmatpush1.msra.mxu0 0.0
    %1064 = vmatprep.subr.mxu0 0.0
    %1065 = vmatpush1.msra.mxu0 0.0
    %1066 = vmatprep.subr.mxu0 0.0
    %1067 = vmatpush1.msra.mxu0 0.0
    %1068 = vmatprep.subr.mxu0 0.0
    %1069 = vmatpush1.msra.mxu0 0.0
    %1070 = vmatprep.subr.mxu0 0.0
    %1071 = vmatpush1.msra.mxu0 0.0
    %1072 = vmatprep.subr.mxu0 0.0
    %1073 = vmatpush1.msra.mxu0 0.0
    %1074 = vmatprep.subr.mxu0 0.0
    %1075 = vmatpush1.msra.mxu0 0.0
    %1076 = vmatprep.subr.mxu0 0.0
    %1077 = vmatpush1.msra.mxu0 0.0
    %1078 = vmatprep.subr.mxu0 0.0
    %1079 = vmatpush1.msra.mxu0 0.0
    %1080 = vmatprep.subr.mxu0 0.0
    %1081 = vmatpush1.msra.mxu0 0.0
    %1082 = vmatprep.subr.mxu0 0.0
    %1083 = vmatpush1.msra.mxu0 0.0
    %1084 = vmatprep.subr.mxu0 0.0
    %1085 = vmatpush1.msra.mxu0 0.0
    %1086 = vmatprep.subr.mxu0 0.0
    %1087 = vmatpush1.msra.mxu0 0.0
    %1088 = vmatprep.subr.mxu0 0.0
    %1089 = vmatpush1.msra.mxu0 0.0
    %1090 = vmatprep.subr.mxu0 0.0
    %1091 = vmatpush1.msra.mxu0 0.0
    %1092 = vmatprep.subr.mxu0 0.0
    %1093 = vmatpush1.msra.mxu0 0.0
    %1094 = vmatprep.subr.mxu0 0.0
    %1095 = vmatpush1.msra.mxu0 0.0
    %1096 = vmatprep.subr.mxu0 0.0
    %1097 = vmatpush1.msra.mxu0 0.0
    %1098 = vmatprep.subr.mxu0 0.0
    %1099 = vmatpush1.msra.mxu0 0.0
    %1100 = vmatprep.subr.mxu0 0.0
    %1101 = vmatpush1.msra.mxu0 0.0
    %1102 = vmatprep.mubr.f32.mxu0 0.0
    %1103 = vmatmul.mubr.f32.gmra.mrb[0].mxu0 %v939
    %v1104 = vpop.f32.mrb[0].mxu0
    %v1105 = vadd.f32 0.0, %v1104
    %v1106 = vpop.f32.mrb[0].mxu0
    %1107 = vdwg.mxu0
    %v1109 = vrot.slane %v1105, 4
    %v1110 = vrot.slane %v1105, 5
    %v1113 = vadd.f32 %v282, %v1109
    %v1114 = vadd.f32 %v287, %v1110
    %v1115 = vtanh.pop %v1113
    %v1116 = vtanh.pop %v1114
    %v1119 = vrot.slane %v1115, 4
    %v1120 = vrot.slane %v1116, 3
    %v1121 = vsel %vm389, %v1120, %v1119
    %v1122 = vsel %vm208, %v1121, 0
    %1124 = vmatprep.subr.mxu0 0.0
    %1125 = vmatpush1.msra.mxu0 %v294
    %1126 = vmatprep.subr.mxu0 0.0
    %1127 = vmatpush1.msra.mxu0 %v295
    %1128 = vmatprep.subr.mxu0 0.0
    %1129 = vmatpush1.msra.mxu0 %v296
    %1130 = vmatprep.subr.mxu0 0.0
    %1131 = vmatpush1.msra.mxu0 %v297
    %1132 = vmatprep.subr.mxu0 0.0
    %1133 = vmatpush1.msra.mxu0 0.0
    %1134 = vmatprep.subr.mxu0 0.0
    %1135 = vmatpush1.msra.mxu0 0.0
    %1136 = vmatprep.subr.mxu0 0.0
    %1137 = vmatpush1.msra.mxu0 0.0
    %1138 = vmatprep.subr.mxu0 0.0
    %1139 = vmatpush1.msra.mxu0 0.0
    %1140 = vmatprep.subr.mxu0 0.0
    %1141 = vmatpush1.msra.mxu0 0.0
    %1142 = vmatprep.subr.mxu0 0.0
    %1143 = vmatpush1.msra.mxu0 0.0
    %1144 = vmatprep.subr.mxu0 0.0
    %1145 = vmatpush1.msra.mxu0 0.0
    %1146 = vmatprep.subr.mxu0 0.0
    %1147 = vmatpush1.msra.mxu0 0.0
    %1148 = vmatprep.subr.mxu0 0.0
    %1149 = vmatpush1.msra.mxu0 0.0
    %1150 = vmatprep.subr.mxu0 0.0
    %1151 = vmatpush1.msra.mxu0 0.0
    %1152 = vmatprep.subr.mxu0 0.0
    %1153 = vmatpush1.msra.mxu0 0.0
    %1154 = vmatprep.subr.mxu0 0.0
    %1155 = vmatpush1.msra.mxu0 0.0
    %1156 = vmatprep.subr.mxu0 0.0
    %1157 = vmatpush1.msra.mxu0 0.0
    %1158 = vmatprep.subr.mxu0 0.0
    %1159 = vmatpush1.msra.mxu0 0.0
    %1160 = vmatprep.subr.mxu0 0.0
    %1161 = vmatpush1.msra.mxu0 0.0
    %1162 = vmatprep.subr.mxu0 0.0
    %1163 = vmatpush1.msra.mxu0 0.0
    %1164 = vmatprep.subr.mxu0 0.0
    %1165 = vmatpush1.msra.mxu0 0.0
    %1166 = vmatprep.subr.mxu0 0.0
    %1167 = vmatpush1.msra.mxu0 0.0
    %1168 = vmatprep.subr.mxu0 0.0
    %1169 = vmatpush1.msra.mxu0 0.0
    %1170 = vmatprep.subr.mxu0 0.0
    %1171 = vmatpush1.msra.mxu0 0.0
    %1172 = vmatprep.subr.mxu0 0.0
    %1173 = vmatpush1.msra.mxu0 0.0
    %1174 = vmatprep.subr.mxu0 0.0
    %1175 = vmatpush1.msra.mxu0 0.0
    %1176 = vmatprep.subr.mxu0 0.0
    %1177 = vmatpush1.msra.mxu0 0.0
    %1178 = vmatprep.subr.mxu0 0.0
    %1179 = vmatpush1.msra.mxu0 0.0
    %1180 = vmatprep.subr.mxu0 0.0
    %1181 = vmatpush1.msra.mxu0 0.0
    %1182 = vmatprep.subr.mxu0 0.0
    %1183 = vmatpush1.msra.mxu0 0.0
    %1184 = vmatprep.subr.mxu0 0.0
    %1185 = vmatpush1.msra.mxu0 0.0
    %1186 = vmatprep.subr.mxu0 0.0
    %1187 = vmatpush1.msra.mxu0 0.0
    %1188 = vmatprep.mubr.f32.mxu0 0.0
    %1189 = vmatmul.mubr.f32.gmra.mrb[0].mxu0 %v1122
    %v1190 = vpop.f32.mrb[0].mxu0
    %v1191 = vadd.f32 %v384, %v1190
    %v1192 = vpop.f32.mrb[0].mxu0
    %1193 = vdwg.mxu0
    %v1196 = vunpack.c.l.s4 1966171168
    %v1197 = vunpack.c.0.s8 %v1196
    %v1198 = vlaneseq
    %v1199 = vshrl.u32 %v1198, 7
    %v1200 = vsub.s32 %v1197, %v1199
    %v1201 = vrot.slane %v1191, %v1200
    %v1202 = vcombine.high %v1201, %v1201
    %v1204 = vunpack.c.l.s4 1966171168
    %v1205 = vunpack.c.0.s8 %v1204
    %v1206 = vlaneseq
    %v1207 = vshrl.u32 %v1206, 7
    %v1208 = vsub.s32 %v1205, %v1207
    %v1209 = vrot.slane %v1201, %v1208
    %v1211 = vunpack.c.l.s4 1966171168
    %v1212 = vunpack.c.0.s8 %v1211
    %v1213 = vlaneseq
    %v1214 = vshrl.u32 %v1213, 7
    %v1215 = vsub.s32 %v1212, %v1214
    %v1216 = vrot.slane %v1202, %v1215
    %1219 = vst.msk [vmem:[#allocation11 + $0x4] sm:$0x1] %vm488, %v1209
    %1220 = vst.msk [vmem:[#allocation11 + $0xc] sm:$0x1] %vm488, %v1216
    %1221 = vmatprep.subr.mxu0 0.0
    %1222 = vmatpush1.msra.mxu0 %v290
    %1223 = vmatprep.subr.mxu0 0.0
    %1224 = vmatpush1.msra.mxu0 %v291
    %1225 = vmatprep.subr.mxu0 0.0
    %1226 = vmatpush1.msra.mxu0 %v292
    %1227 = vmatprep.subr.mxu0 0.0
    %1228 = vmatpush1.msra.mxu0 %v293
    %1229 = vmatprep.subr.mxu0 0.0
    %1230 = vmatpush1.msra.mxu0 0.0
    %1231 = vmatprep.subr.mxu0 0.0
    %1232 = vmatpush1.msra.mxu0 0.0
    %1233 = vmatprep.subr.mxu0 0.0
    %1234 = vmatpush1.msra.mxu0 0.0
    %1235 = vmatprep.subr.mxu0 0.0
    %1236 = vmatpush1.msra.mxu0 0.0
    %1237 = vmatprep.subr.mxu0 0.0
    %1238 = vmatpush1.msra.mxu0 0.0
    %1239 = vmatprep.subr.mxu0 0.0
    %1240 = vmatpush1.msra.mxu0 0.0
    %1241 = vmatprep.subr.mxu0 0.0
    %1242 = vmatpush1.msra.mxu0 0.0
    %1243 = vmatprep.subr.mxu0 0.0
    %1244 = vmatpush1.msra.mxu0 0.0
    %1245 = vmatprep.subr.mxu0 0.0
    %1246 = vmatpush1.msra.mxu0 0.0
    %1247 = vmatprep.subr.mxu0 0.0
    %1248 = vmatpush1.msra.mxu0 0.0
    %1249 = vmatprep.subr.mxu0 0.0
    %1250 = vmatpush1.msra.mxu0 0.0
    %1251 = vmatprep.subr.mxu0 0.0
    %1252 = vmatpush1.msra.mxu0 0.0
    %1253 = vmatprep.subr.mxu0 0.0
    %1254 = vmatpush1.msra.mxu0 0.0
    %1255 = vmatprep.subr.mxu0 0.0
    %1256 = vmatpush1.msra.mxu0 0.0
    %1257 = vmatprep.subr.mxu0 0.0
    %1258 = vmatpush1.msra.mxu0 0.0
    %1259 = vmatprep.subr.mxu0 0.0
    %1260 = vmatpush1.msra.mxu0 0.0
    %1261 = vmatprep.subr.mxu0 0.0
    %1262 = vmatpush1.msra.mxu0 0.0
    %1263 = vmatprep.subr.mxu0 0.0
    %1264 = vmatpush1.msra.mxu0 0.0
    %1265 = vmatprep.subr.mxu0 0.0
    %1266 = vmatpush1.msra.mxu0 0.0
    %1267 = vmatprep.subr.mxu0 0.0
    %1268 = vmatpush1.msra.mxu0 0.0
    %1269 = vmatprep.subr.mxu0 0.0
    %1270 = vmatpush1.msra.mxu0 0.0
    %1271 = vmatprep.subr.mxu0 0.0
    %1272 = vmatpush1.msra.mxu0 0.0
    %1273 = vmatprep.subr.mxu0 0.0
    %1274 = vmatpush1.msra.mxu0 0.0
    %1275 = vmatprep.subr.mxu0 0.0
    %1276 = vmatpush1.msra.mxu0 0.0
    %1277 = vmatprep.subr.mxu0 0.0
    %1278 = vmatpush1.msra.mxu0 0.0
    %1279 = vmatprep.subr.mxu0 0.0
    %1280 = vmatpush1.msra.mxu0 0.0
    %1281 = vmatprep.subr.mxu0 0.0
    %1282 = vmatpush1.msra.mxu0 0.0
    %1283 = vmatprep.subr.mxu0 0.0
    %1284 = vmatpush1.msra.mxu0 0.0
    %1285 = vmatprep.mubr.f32.mxu0 0.0
    %1286 = vmatmul.mubr.f32.gmra.mrb[0].mxu0 %v1122
    %v1287 = vpop.f32.mrb[0].mxu0
    %v1288 = vadd.f32 0.0, %v1287
    %v1289 = vpop.f32.mrb[0].mxu0
    %1290 = vdwg.mxu0
    %v1292 = vrot.slane %v1288, 3
    %v1293 = vrot.slane %v1288, 4
    %v1296 = vadd.f32 %v282, %v1292
    %v1297 = vadd.f32 %v287, %v1293
    %v1298 = vtanh.pop %v1296
    %v1299 = vtanh.pop %v1297
    %v1302 = vrot.slane %v1298, 5
    %v1303 = vrot.slane %v1299, 4
    %v1304 = vsel %vm389, %v1303, %v1302
    %v1305 = vsel %vm208, %v1304, 0
    %1307 = vmatprep.subr.mxu0 0.0
    %1308 = vmatpush1.msra.mxu0 %v294
    %1309 = vmatprep.subr.mxu0 0.0
    %1310 = vmatpush1.msra.mxu0 %v295
    %1311 = vmatprep.subr.mxu0 0.0
    %1312 = vmatpush1.msra.mxu0 %v296
    %1313 = vmatprep.subr.mxu0 0.0
    %1314 = vmatpush1.msra.mxu0 %v297
    %1315 = vmatprep.subr.mxu0 0.0
    %1316 = vmatpush1.msra.mxu0 0.0
    %1317 = vmatprep.subr.mxu0 0.0
    %1318 = vmatpush1.msra.mxu0 0.0
    %1319 = vmatprep.subr.mxu0 0.0
    %1320 = vmatpush1.msra.mxu0 0.0
    %1321 = vmatprep.subr.mxu0 0.0
    %1322 = vmatpush1.msra.mxu0 0.0
    %1323 = vmatprep.subr.mxu0 0.0
    %1324 = vmatpush1.msra.mxu0 0.0
    %1325 = vmatprep.subr.mxu0 0.0
    %1326 = vmatpush1.msra.mxu0 0.0
    %1327 = vmatprep.subr.mxu0 0.0
    %1328 = vmatpush1.msra.mxu0 0.0
    %1329 = vmatprep.subr.mxu0 0.0
    %1330 = vmatpush1.msra.mxu0 0.0
    %1331 = vmatprep.subr.mxu0 0.0
    %1332 = vmatpush1.msra.mxu0 0.0
    %1333 = vmatprep.subr.mxu0 0.0
    %1334 = vmatpush1.msra.mxu0 0.0
    %1335 = vmatprep.subr.mxu0 0.0
    %1336 = vmatpush1.msra.mxu0 0.0
    %1337 = vmatprep.subr.mxu0 0.0
    %1338 = vmatpush1.msra.mxu0 0.0
    %1339 = vmatprep.subr.mxu0 0.0
    %1340 = vmatpush1.msra.mxu0 0.0
    %1341 = vmatprep.subr.mxu0 0.0
    %1342 = vmatpush1.msra.mxu0 0.0
    %1343 = vmatprep.subr.mxu0 0.0
    %1344 = vmatpush1.msra.mxu0 0.0
    %1345 = vmatprep.subr.mxu0 0.0
    %1346 = vmatpush1.msra.mxu0 0.0
    %1347 = vmatprep.subr.mxu0 0.0
    %1348 = vmatpush1.msra.mxu0 0.0
    %1349 = vmatprep.subr.mxu0 0.0
    %1350 = vmatpush1.msra.mxu0 0.0
    %1351 = vmatprep.subr.mxu0 0.0
    %1352 = vmatpush1.msra.mxu0 0.0
    %1353 = vmatprep.subr.mxu0 0.0
    %1354 = vmatpush1.msra.mxu0 0.0
    %1355 = vmatprep.subr.mxu0 0.0
    %1356 = vmatpush1.msra.mxu0 0.0
    %1357 = vmatprep.subr.mxu0 0.0
    %1358 = vmatpush1.msra.mxu0 0.0
    %1359 = vmatprep.subr.mxu0 0.0
    %1360 = vmatpush1.msra.mxu0 0.0
    %1361 = vmatprep.subr.mxu0 0.0
    %1362 = vmatpush1.msra.mxu0 0.0
    %1363 = vmatprep.subr.mxu0 0.0
    %1364 = vmatpush1.msra.mxu0 0.0
    %1365 = vmatprep.subr.mxu0 0.0
    %1366 = vmatpush1.msra.mxu0 0.0
    %1367 = vmatprep.subr.mxu0 0.0
    %1368 = vmatpush1.msra.mxu0 0.0
    %1369 = vmatprep.subr.mxu0 0.0
    %1370 = vmatpush1.msra.mxu0 0.0
    %1371 = vmatprep.mubr.f32.mxu0 0.0
    %1372 = vmatmul.mubr.f32.gmra.mrb[0].mxu0 %v1305
    %v1373 = vpop.f32.mrb[0].mxu0
    %v1374 = vadd.f32 %v384, %v1373
    %v1375 = vpop.f32.mrb[0].mxu0
    %1376 = vdwg.mxu0
    %v1379 = vunpack.c.l.s4 1966171168
    %v1380 = vunpack.c.0.s8 %v1379
    %v1381 = vlaneseq
    %v1382 = vshrl.u32 %v1381, 7
    %v1383 = vsub.s32 %v1380, %v1382
    %v1384 = vrot.slane %v1374, %v1383
    %v1385 = vcombine.high %v1384, %v1384
    %v1387 = vunpack.c.l.s4 1966171168
    %v1388 = vunpack.c.0.s8 %v1387
    %v1389 = vlaneseq
    %v1390 = vshrl.u32 %v1389, 7
    %v1391 = vsub.s32 %v1388, %v1390
    %v1392 = vrot.slane %v1384, %v1391
    %v1394 = vunpack.c.l.s4 1966171168
    %v1395 = vunpack.c.0.s8 %v1394
    %v1396 = vlaneseq
    %v1397 = vshrl.u32 %v1396, 7
    %v1398 = vsub.s32 %v1395, %v1397
    %v1399 = vrot.slane %v1385, %v1398
    %1402 = vst.msk [vmem:[#allocation11 + $0x5] sm:$0x1] %vm488, %v1392
    %1403 = vst.msk [vmem:[#allocation11 + $0xd] sm:$0x1] %vm488, %v1399
    %1404 = vmatprep.subr.mxu0 0.0
    %1405 = vmatpush1.msra.mxu0 %v290
    %1406 = vmatprep.subr.mxu0 0.0
    %1407 = vmatpush1.msra.mxu0 %v291
    %1408 = vmatprep.subr.mxu0 0.0
    %1409 = vmatpush1.msra.mxu0 %v292
    %1410 = vmatprep.subr.mxu0 0.0
    %1411 = vmatpush1.msra.mxu0 %v293
    %1412 = vmatprep.subr.mxu0 0.0
    %1413 = vmatpush1.msra.mxu0 0.0
    %1414 = vmatprep.subr.mxu0 0.0
    %1415 = vmatpush1.msra.mxu0 0.0
    %1416 = vmatprep.subr.mxu0 0.0
    %1417 = vmatpush1.msra.mxu0 0.0
    %1418 = vmatprep.subr.mxu0 0.0
    %1419 = vmatpush1.msra.mxu0 0.0
    %1420 = vmatprep.subr.mxu0 0.0
    %1421 = vmatpush1.msra.mxu0 0.0
    %1422 = vmatprep.subr.mxu0 0.0
    %1423 = vmatpush1.msra.mxu0 0.0
    %1424 = vmatprep.subr.mxu0 0.0
    %1425 = vmatpush1.msra.mxu0 0.0
    %1426 = vmatprep.subr.mxu0 0.0
    %1427 = vmatpush1.msra.mxu0 0.0
    %1428 = vmatprep.subr.mxu0 0.0
    %1429 = vmatpush1.msra.mxu0 0.0
    %1430 = vmatprep.subr.mxu0 0.0
    %1431 = vmatpush1.msra.mxu0 0.0
    %1432 = vmatprep.subr.mxu0 0.0
    %1433 = vmatpush1.msra.mxu0 0.0
    %1434 = vmatprep.subr.mxu0 0.0
    %1435 = vmatpush1.msra.mxu0 0.0
    %1436 = vmatprep.subr.mxu0 0.0
    %1437 = vmatpush1.msra.mxu0 0.0
    %1438 = vmatprep.subr.mxu0 0.0
    %1439 = vmatpush1.msra.mxu0 0.0
    %1440 = vmatprep.subr.mxu0 0.0
    %1441 = vmatpush1.msra.mxu0 0.0
    %1442 = vmatprep.subr.mxu0 0.0
    %1443 = vmatpush1.msra.mxu0 0.0
    %1444 = vmatprep.subr.mxu0 0.0
    %1445 = vmatpush1.msra.mxu0 0.0
    %1446 = vmatprep.subr.mxu0 0.0
    %1447 = vmatpush1.msra.mxu0 0.0
    %1448 = vmatprep.subr.mxu0 0.0
    %1449 = vmatpush1.msra.mxu0 0.0
    %1450 = vmatprep.subr.mxu0 0.0
    %1451 = vmatpush1.msra.mxu0 0.0
    %1452 = vmatprep.subr.mxu0 0.0
    %1453 = vmatpush1.msra.mxu0 0.0
    %1454 = vmatprep.subr.mxu0 0.0
    %1455 = vmatpush1.msra.mxu0 0.0
    %1456 = vmatprep.subr.mxu0 0.0
    %1457 = vmatpush1.msra.mxu0 0.0
    %1458 = vmatprep.subr.mxu0 0.0
    %1459 = vmatpush1.msra.mxu0 0.0
    %1460 = vmatprep.subr.mxu0 0.0
    %1461 = vmatpush1.msra.mxu0 0.0
    %1462 = vmatprep.subr.mxu0 0.0
    %1463 = vmatpush1.msra.mxu0 0.0
    %1464 = vmatprep.subr.mxu0 0.0
    %1465 = vmatpush1.msra.mxu0 0.0
    %1466 = vmatprep.subr.mxu0 0.0
    %1467 = vmatpush1.msra.mxu0 0.0
    %1468 = vmatprep.mubr.f32.mxu0 0.0
    %1469 = vmatmul.mubr.f32.gmra.mrb[0].mxu0 %v1305
    %v1470 = vpop.f32.mrb[0].mxu0
    %v1471 = vadd.f32 0.0, %v1470
    %v1472 = vpop.f32.mrb[0].mxu0
    %1473 = vdwg.mxu0
    %v1475 = vrot.slane %v1471, 2
    %v1476 = vrot.slane %v1471, 3
    %v1479 = vadd.f32 %v282, %v1475
    %v1480 = vadd.f32 %v287, %v1476
    %v1481 = vtanh.pop %v1479
    %v1482 = vtanh.pop %v1480
    %v1485 = vrot.slane %v1481, 6
    %v1486 = vrot.slane %v1482, 5
    %v1487 = vsel %vm389, %v1486, %v1485
    %v1488 = vsel %vm208, %v1487, 0
    %1490 = vmatprep.subr.mxu0 0.0
    %1491 = vmatpush1.msra.mxu0 %v294
    %1492 = vmatprep.subr.mxu0 0.0
    %1493 = vmatpush1.msra.mxu0 %v295
    %1494 = vmatprep.subr.mxu0 0.0
    %1495 = vmatpush1.msra.mxu0 %v296
    %1496 = vmatprep.subr.mxu0 0.0
    %1497 = vmatpush1.msra.mxu0 %v297
    %1498 = vmatprep.subr.mxu0 0.0
    %1499 = vmatpush1.msra.mxu0 0.0
    %1500 = vmatprep.subr.mxu0 0.0
    %1501 = vmatpush1.msra.mxu0 0.0
    %1502 = vmatprep.subr.mxu0 0.0
    %1503 = vmatpush1.msra.mxu0 0.0
    %1504 = vmatprep.subr.mxu0 0.0
    %1505 = vmatpush1.msra.mxu0 0.0
    %1506 = vmatprep.subr.mxu0 0.0
    %1507 = vmatpush1.msra.mxu0 0.0
    %1508 = vmatprep.subr.mxu0 0.0
    %1509 = vmatpush1.msra.mxu0 0.0
    %1510 = vmatprep.subr.mxu0 0.0
    %1511 = vmatpush1.msra.mxu0 0.0
    %1512 = vmatprep.subr.mxu0 0.0
    %1513 = vmatpush1.msra.mxu0 0.0
    %1514 = vmatprep.subr.mxu0 0.0
    %1515 = vmatpush1.msra.mxu0 0.0
    %1516 = vmatprep.subr.mxu0 0.0
    %1517 = vmatpush1.msra.mxu0 0.0
    %1518 = vmatprep.subr.mxu0 0.0
    %1519 = vmatpush1.msra.mxu0 0.0
    %1520 = vmatprep.subr.mxu0 0.0
    %1521 = vmatpush1.msra.mxu0 0.0
    %1522 = vmatprep.subr.mxu0 0.0
    %1523 = vmatpush1.msra.mxu0 0.0
    %1524 = vmatprep.subr.mxu0 0.0
    %1525 = vmatpush1.msra.mxu0 0.0
    %1526 = vmatprep.subr.mxu0 0.0
    %1527 = vmatpush1.msra.mxu0 0.0
    %1528 = vmatprep.subr.mxu0 0.0
    %1529 = vmatpush1.msra.mxu0 0.0
    %1530 = vmatprep.subr.mxu0 0.0
    %1531 = vmatpush1.msra.mxu0 0.0
    %1532 = vmatprep.subr.mxu0 0.0
    %1533 = vmatpush1.msra.mxu0 0.0
    %1534 = vmatprep.subr.mxu0 0.0
    %1535 = vmatpush1.msra.mxu0 0.0
    %1536 = vmatprep.subr.mxu0 0.0
    %1537 = vmatpush1.msra.mxu0 0.0
    %1538 = vmatprep.subr.mxu0 0.0
    %1539 = vmatpush1.msra.mxu0 0.0
    %1540 = vmatprep.subr.mxu0 0.0
    %1541 = vmatpush1.msra.mxu0 0.0
    %1542 = vmatprep.subr.mxu0 0.0
    %1543 = vmatpush1.msra.mxu0 0.0
    %1544 = vmatprep.subr.mxu0 0.0
    %1545 = vmatpush1.msra.mxu0 0.0
    %1546 = vmatprep.subr.mxu0 0.0
    %1547 = vmatpush1.msra.mxu0 0.0
    %1548 = vmatprep.subr.mxu0 0.0
    %1549 = vmatpush1.msra.mxu0 0.0
    %1550 = vmatprep.subr.mxu0 0.0
    %1551 = vmatpush1.msra.mxu0 0.0
    %1552 = vmatprep.subr.mxu0 0.0
    %1553 = vmatpush1.msra.mxu0 0.0
    %1554 = vmatprep.mubr.f32.mxu0 0.0
    %1555 = vmatmul.mubr.f32.gmra.mrb[0].mxu0 %v1488
    %v1556 = vpop.f32.mrb[0].mxu0
    %v1557 = vadd.f32 %v384, %v1556
    %v1558 = vpop.f32.mrb[0].mxu0
    %1559 = vdwg.mxu0
    %v1562 = vunpack.c.l.s4 1966171168
    %v1563 = vunpack.c.0.s8 %v1562
    %v1564 = vlaneseq
    %v1565 = vshrl.u32 %v1564, 7
    %v1566 = vsub.s32 %v1563, %v1565
    %v1567 = vrot.slane %v1557, %v1566
    %v1568 = vcombine.high %v1567, %v1567
    %v1570 = vunpack.c.l.s4 1966171168
    %v1571 = vunpack.c.0.s8 %v1570
    %v1572 = vlaneseq
    %v1573 = vshrl.u32 %v1572, 7
    %v1574 = vsub.s32 %v1571, %v1573
    %v1575 = vrot.slane %v1567, %v1574
    %v1577 = vunpack.c.l.s4 1966171168
    %v1578 = vunpack.c.0.s8 %v1577
    %v1579 = vlaneseq
    %v1580 = vshrl.u32 %v1579, 7
    %v1581 = vsub.s32 %v1578, %v1580
    %v1582 = vrot.slane %v1568, %v1581
    %1585 = vst.msk [vmem:[#allocation11 + $0x6] sm:$0x1] %vm488, %v1575
    %1586 = vst.msk [vmem:[#allocation11 + $0xe] sm:$0x1] %vm488, %v1582
    %1587 = vmatprep.subr.mxu0 0.0
    %1588 = vmatpush1.msra.mxu0 %v290
    %1589 = vmatprep.subr.mxu0 0.0
    %1590 = vmatpush1.msra.mxu0 %v291
    %1591 = vmatprep.subr.mxu0 0.0
    %1592 = vmatpush1.msra.mxu0 %v292
    %1593 = vmatprep.subr.mxu0 0.0
    %1594 = vmatpush1.msra.mxu0 %v293
    %1595 = vmatprep.subr.mxu0 0.0
    %1596 = vmatpush1.msra.mxu0 0.0
    %1597 = vmatprep.subr.mxu0 0.0
    %1598 = vmatpush1.msra.mxu0 0.0
    %1599 = vmatprep.subr.mxu0 0.0
    %1600 = vmatpush1.msra.mxu0 0.0
    %1601 = vmatprep.subr.mxu0 0.0
    %1602 = vmatpush1.msra.mxu0 0.0
    %1603 = vmatprep.subr.mxu0 0.0
    %1604 = vmatpush1.msra.mxu0 0.0
    %1605 = vmatprep.subr.mxu0 0.0
    %1606 = vmatpush1.msra.mxu0 0.0
    %1607 = vmatprep.subr.mxu0 0.0
    %1608 = vmatpush1.msra.mxu0 0.0
    %1609 = vmatprep.subr.mxu0 0.0
    %1610 = vmatpush1.msra.mxu0 0.0
    %1611 = vmatprep.subr.mxu0 0.0
    %1612 = vmatpush1.msra.mxu0 0.0
    %1613 = vmatprep.subr.mxu0 0.0
    %1614 = vmatpush1.msra.mxu0 0.0
    %1615 = vmatprep.subr.mxu0 0.0
    %1616 = vmatpush1.msra.mxu0 0.0
    %1617 = vmatprep.subr.mxu0 0.0
    %1618 = vmatpush1.msra.mxu0 0.0
    %1619 = vmatprep.subr.mxu0 0.0
    %1620 = vmatpush1.msra.mxu0 0.0
    %1621 = vmatprep.subr.mxu0 0.0
    %1622 = vmatpush1.msra.mxu0 0.0
    %1623 = vmatprep.subr.mxu0 0.0
    %1624 = vmatpush1.msra.mxu0 0.0
    %1625 = vmatprep.subr.mxu0 0.0
    %1626 = vmatpush1.msra.mxu0 0.0
    %1627 = vmatprep.subr.mxu0 0.0
    %1628 = vmatpush1.msra.mxu0 0.0
    %1629 = vmatprep.subr.mxu0 0.0
    %1630 = vmatpush1.msra.mxu0 0.0
    %1631 = vmatprep.subr.mxu0 0.0
    %1632 = vmatpush1.msra.mxu0 0.0
    %1633 = vmatprep.subr.mxu0 0.0
    %1634 = vmatpush1.msra.mxu0 0.0
    %1635 = vmatprep.subr.mxu0 0.0
    %1636 = vmatpush1.msra.mxu0 0.0
    %1637 = vmatprep.subr.mxu0 0.0
    %1638 = vmatpush1.msra.mxu0 0.0
    %1639 = vmatprep.subr.mxu0 0.0
    %1640 = vmatpush1.msra.mxu0 0.0
    %1641 = vmatprep.subr.mxu0 0.0
    %1642 = vmatpush1.msra.mxu0 0.0
    %1643 = vmatprep.subr.mxu0 0.0
    %1644 = vmatpush1.msra.mxu0 0.0
    %1645 = vmatprep.subr.mxu0 0.0
    %1646 = vmatpush1.msra.mxu0 0.0
    %1647 = vmatprep.subr.mxu0 0.0
    %1648 = vmatpush1.msra.mxu0 0.0
    %1649 = vmatprep.subr.mxu0 0.0
    %1650 = vmatpush1.msra.mxu0 0.0
    %1651 = vmatprep.mubr.f32.mxu0 0.0
    %1652 = vmatmul.mubr.f32.gmra.mrb[0].mxu0 %v1488
    %v1653 = vpop.f32.mrb[0].mxu0
    %v1654 = vadd.f32 0.0, %v1653
    %v1655 = vpop.f32.mrb[0].mxu0
    %1656 = vdwg.mxu0
    %v1658 = vrot.slane %v1654, 1
    %v1659 = vrot.slane %v1654, 2
    %v1662 = vadd.f32 %v282, %v1658
    %v1663 = vadd.f32 %v287, %v1659
    %v1664 = vtanh.pop %v1662
    %v1665 = vtanh.pop %v1663
    %v1668 = vrot.slane %v1664, 7
    %v1669 = vrot.slane %v1665, 6
    %v1670 = vsel %vm389, %v1669, %v1668
    %v1671 = vsel %vm208, %v1670, 0
    %1673 = vmatprep.subr.mxu0 0.0
    %1674 = vmatpush1.msra.mxu0 %v294
    %1675 = vmatprep.subr.mxu0 0.0
    %1676 = vmatpush1.msra.mxu0 %v295
    %1677 = vmatprep.subr.mxu0 0.0
    %1678 = vmatpush1.msra.mxu0 %v296
    %1679 = vmatprep.subr.mxu0 0.0
    %1680 = vmatpush1.msra.mxu0 %v297
    %1681 = vmatprep.subr.mxu0 0.0
    %1682 = vmatpush1.msra.mxu0 0.0
    %1683 = vmatprep.subr.mxu0 0.0
    %1684 = vmatpush1.msra.mxu0 0.0
    %1685 = vmatprep.subr.mxu0 0.0
    %1686 = vmatpush1.msra.mxu0 0.0
    %1687 = vmatprep.subr.mxu0 0.0
    %1688 = vmatpush1.msra.mxu0 0.0
    %1689 = vmatprep.subr.mxu0 0.0
    %1690 = vmatpush1.msra.mxu0 0.0
    %1691 = vmatprep.subr.mxu0 0.0
    %1692 = vmatpush1.msra.mxu0 0.0
    %1693 = vmatprep.subr.mxu0 0.0
    %1694 = vmatpush1.msra.mxu0 0.0
    %1695 = vmatprep.subr.mxu0 0.0
    %1696 = vmatpush1.msra.mxu0 0.0
    %1697 = vmatprep.subr.mxu0 0.0
    %1698 = vmatpush1.msra.mxu0 0.0
    %1699 = vmatprep.subr.mxu0 0.0
    %1700 = vmatpush1.msra.mxu0 0.0
    %1701 = vmatprep.subr.mxu0 0.0
    %1702 = vmatpush1.msra.mxu0 0.0
    %1703 = vmatprep.subr.mxu0 0.0
    %1704 = vmatpush1.msra.mxu0 0.0
    %1705 = vmatprep.subr.mxu0 0.0
    %1706 = vmatpush1.msra.mxu0 0.0
    %1707 = vmatprep.subr.mxu0 0.0
    %1708 = vmatpush1.msra.mxu0 0.0
    %1709 = vmatprep.subr.mxu0 0.0
    %1710 = vmatpush1.msra.mxu0 0.0
    %1711 = vmatprep.subr.mxu0 0.0
    %1712 = vmatpush1.msra.mxu0 0.0
    %1713 = vmatprep.subr.mxu0 0.0
    %1714 = vmatpush1.msra.mxu0 0.0
    %1715 = vmatprep.subr.mxu0 0.0
    %1716 = vmatpush1.msra.mxu0 0.0
    %1717 = vmatprep.subr.mxu0 0.0
    %1718 = vmatpush1.msra.mxu0 0.0
    %1719 = vmatprep.subr.mxu0 0.0
    %1720 = vmatpush1.msra.mxu0 0.0
    %1721 = vmatprep.subr.mxu0 0.0
    %1722 = vmatpush1.msra.mxu0 0.0
    %1723 = vmatprep.subr.mxu0 0.0
    %1724 = vmatpush1.msra.mxu0 0.0
    %1725 = vmatprep.subr.mxu0 0.0
    %1726 = vmatpush1.msra.mxu0 0.0
    %1727 = vmatprep.subr.mxu0 0.0
    %1728 = vmatpush1.msra.mxu0 0.0
    %1729 = vmatprep.subr.mxu0 0.0
    %1730 = vmatpush1.msra.mxu0 0.0
    %1731 = vmatprep.subr.mxu0 0.0
    %1732 = vmatpush1.msra.mxu0 0.0
    %1733 = vmatprep.subr.mxu0 0.0
    %1734 = vmatpush1.msra.mxu0 0.0
    %1735 = vmatprep.subr.mxu0 0.0
    %1736 = vmatpush1.msra.mxu0 0.0
    %1737 = vmatprep.mubr.f32.mxu0 0.0
    %1738 = vmatmul.mubr.f32.gmra.mrb[0].mxu0 %v1671
    %v1739 = vpop.f32.mrb[0].mxu0
    %v1740 = vadd.f32 %v384, %v1739
    %v1741 = vpop.f32.mrb[0].mxu0
    %1742 = vdwg.mxu0
    %v1745 = vunpack.c.l.s4 1966171168
    %v1746 = vunpack.c.0.s8 %v1745
    %v1747 = vlaneseq
    %v1748 = vshrl.u32 %v1747, 7
    %v1749 = vsub.s32 %v1746, %v1748
    %v1750 = vrot.slane %v1740, %v1749
    %v1751 = vcombine.high %v1750, %v1750
    %v1753 = vunpack.c.l.s4 1966171168
    %v1754 = vunpack.c.0.s8 %v1753
    %v1755 = vlaneseq
    %v1756 = vshrl.u32 %v1755, 7
    %v1757 = vsub.s32 %v1754, %v1756
    %v1758 = vrot.slane %v1750, %v1757
    %v1760 = vunpack.c.l.s4 1966171168
    %v1761 = vunpack.c.0.s8 %v1760
    %v1762 = vlaneseq
    %v1763 = vshrl.u32 %v1762, 7
    %v1764 = vsub.s32 %v1761, %v1763
    %v1765 = vrot.slane %v1751, %v1764
    %1768 = vst.msk [vmem:[#allocation11 + $0x7] sm:$0x1] %vm488, %v1758
    %1769 = vst.msk [vmem:[#allocation11 + $0xf] sm:$0x1] %vm488, %v1765
    // Predicated region
    $region54: #{rnn_head_forward.1} parent=1 // pred_check
      _
    $region55: #{rnn_head_forward.1} parent=1 // pred_check_branch
      %1771 = sbr.rel (0) target = $region57
    $region56: #{rnn_head_forward.1} parent=1 // pred_region
      %s1773 = ssub.s32 256, 256
      %1774 = vsyncadd [#allocation4], %s1773
      %s1775 = sshll.u32 [#allocation11], 4
      %s1776 = int_to_ptr.vmem [resolvable:$true] %s1775
      %1781 = dma.vmem_to_hbm [thread:$0]  %s1776, 256, %s8, [#allocation4], 128, 128, 8
    $region57: #{rnn_head_forward.1} parent=1 // pred_fallthru
      _
    // Predicated region
    $region58: #{rnn_head_forward.1} parent=1 // pred_check
      _
    $region59: #{rnn_head_forward.1} parent=1 // pred_check_branch
      %1783 = sbr.rel (0) target = $region61
    $region60: #{rnn_head_forward.1} parent=1 // pred_region
      %1784 = dma.done [#allocation4], 256
    $region61: #{rnn_head_forward.1} parent=1 // pred_fallthru
      _
    %1785 = vsyncpa [#allocation3], 1
    %1786 = vsyncpa [#allocation6], 1
    %1787 = vsyncpa [#allocation9], 1
    %1788 = vsyncpa [#allocation4], 1

</llo_original>
